<compile_context>
chip_gen: v7x
topology: tpu7x:2x2x1
jax: 0.10.0
libtpu: 0.0.40
codegen_flags: <defaults>
</compile_context>

<pallas_src>
import functools

import jax
import jax.numpy as jnp
from jax import lax
from jax.experimental import pallas as pl
from jax.experimental.pallas import tpu as pltpu

_LN_EPS = 1e-5                      # PyTorch nn.LayerNorm default
_LANE = 128
_SUBLANE = 8
_VMEM_SOFT_DEFAULT = 16 * 2**20     # smallest default scoped VMEM (v5e)
_VMEM_CAP = 40 * 2**20              # stay well under v7x's 64 MiB physical


def _round_up(n, m):
    return ((n + m - 1) // m) * m


def _pad_feat(n):
    return max(_LANE, _round_up(n, _LANE))


# ---------------------------------------------------------------------------
# Fused kernel: entire MLP for one batch tile
# ---------------------------------------------------------------------------
def _fused_mlp_kernel(*refs, true_dims):
    """refs = (x_ref, [w, b, gamma, beta] * n_blocks, w_final, b_final, o_ref).

    Feature dims are padded to multiples of 128; true_dims[l] is the real
    output width of hidden layer l (LayerNorm denominator).  Padded weight
    columns / bias / gamma / beta entries are zero, so padded activation
    columns stay exactly zero through every layer.
    """
    x_ref, o_ref = refs[0], refs[-1]
    p = refs[1:-1]
    n_blocks = (len(p) - 2) // 4

    # Carry activations in bf16 between layers (cast is needed before every
    # MXU dot anyway); LayerNorm statistics are computed in f32.
    h = x_ref[...].astype(jnp.bfloat16)
    for l in range(n_blocks):
        w, b, g, beta = p[4 * l:4 * l + 4]
        d_true = true_dims[l]
        d_pad = g.shape[-1]

        # Linear on the MXU: bf16 inputs, f32 accumulation.
        y = jnp.dot(h, w[...], preferred_element_type=jnp.float32) + b[...]
        y = jnp.maximum(y, 0.0)                 # ReLU (padded cols stay 0)

        # LayerNorm over the TRUE feature width.  Padded columns of y are
        # exactly 0, so `centered` there is exactly -mean; subtract their
        # (d_pad - d_true) * mean^2 contribution instead of masking.
        inv_d = jnp.float32(1.0 / d_true)
        mean = jnp.sum(y, axis=-1, keepdims=True) * inv_d
        centered = y - mean
        sumsq = jnp.sum(centered * centered, axis=-1, keepdims=True)
        var = (sumsq - jnp.float32(d_pad - d_true) * mean * mean) * inv_d
        # gamma/beta are zero on padded columns -> padded h stays exactly 0.
        h = (centered * lax.rsqrt(var + _LN_EPS) * g[...]
             + beta[...]).astype(jnp.bfloat16)

    # Final Linear (no activation / LN); write only the true output width.
    w_f, b_f = p[-2], p[-1]
    y = jnp.dot(h, w_f[...], preferred_element_type=jnp.float32) + b_f[...]
    o_ref[...] = y[:, : o_ref.shape[-1]].astype(o_ref.dtype)


# ---------------------------------------------------------------------------
# Parameter packing (runs ONCE, at model-construction time)
# ---------------------------------------------------------------------------
def pack_params(params):
    """Pad feature dims to 128 multiples, cast weights to bf16.

    params = {"blocks": [(w(din,dout), b(1,dout), gamma(1,dout), beta(1,dout))],
              "final": (w(din,dout), b(1,dout))}
    Returns (flat_padded_arrays, true_hidden_out_dims, final_out_dim).
    """
    flat = []
    true_dims = []
    for (w, b, g, beta) in params["blocks"]:
        din, dout = w.shape
        dinp, doutp = _pad_feat(din), _pad_feat(dout)
        wp = jnp.zeros((dinp, doutp), jnp.bfloat16).at[:din, :dout].set(
            w.astype(jnp.bfloat16))
        bp = jnp.zeros((1, doutp), jnp.float32).at[:, :dout].set(b)
        gp = jnp.zeros((1, doutp), jnp.float32).at[:, :dout].set(g)
        btp = jnp.zeros((1, doutp), jnp.float32).at[:, :dout].set(beta)
        flat += [wp, bp, gp, btp]
        true_dims.append(dout)
    w, b = params["final"]
    din, dout = w.shape
    dinp, doutp = _pad_feat(din), _pad_feat(dout)
    wp = jnp.zeros((dinp, doutp), jnp.bfloat16).at[:din, :dout].set(
        w.astype(jnp.bfloat16))
    bp = jnp.zeros((1, doutp), jnp.float32).at[:, :dout].set(b)
    flat += [wp, bp]
    return tuple(flat), tuple(true_dims), int(dout)


# ---------------------------------------------------------------------------
# Batch-tile selection: big tiles, >=2 grid steps when possible (v7x megacore)
# ---------------------------------------------------------------------------
def _pick_tb(batch, block_batch):
    if batch <= _SUBLANE:
        return batch                           # block dim == full array dim
    tb = _round_up(pl.cdiv(batch, 2), _SUBLANE)
    return max(_SUBLANE, min(block_batch, tb))


# ---------------------------------------------------------------------------
# Single fused pallas_call over a (possibly ragged) batch grid
# ---------------------------------------------------------------------------
@functools.partial(
    jax.jit,
    static_argnames=("true_dims", "out_dim", "block_batch",
                     "single_buffer_params"))
def _fused_forward(x, flat_params, *, true_dims, out_dim, block_batch,
                   single_buffer_params):
    B, D0 = x.shape
    D0p = flat_params[0].shape[0]             # padded input width, layer 0

    # Pad only the feature dim, and only if it is not already lane-aligned.
    if D0 != D0p:
        x = jnp.pad(x, ((0, 0), (0, D0p - D0)))

    TB = _pick_tb(B, block_batch)
    grid = (pl.cdiv(B, TB),)                  # ragged last tile is fine: all
                                              # math is row-wise, OOB writes
                                              # are dropped by Pallas.

    # Constant-index parameter blocks stay resident in VMEM for the whole
    # grid; single-buffer them (they are never re-fetched).
    param_kwargs = (dict(pipeline_mode=pl.Buffered(1))
                    if single_buffer_params else {})
    in_specs = [pl.BlockSpec((TB, D0p), lambda i: (i, 0))]
    for a in flat_params:
        in_specs.append(pl.BlockSpec(a.shape, lambda i: (0, 0), **param_kwargs))
    out_specs = pl.BlockSpec((TB, out_dim), lambda i: (i, 0))

    # Explicit VMEM budget (v7x: 64 MiB physical / 32 MiB default scoped;
    # v5e default scoped is 16 MiB).  Only override when we would exceed the
    # smallest default; cap well under v7x physical.
    param_bytes = sum(a.size * a.dtype.itemsize for a in flat_params)
    io_bytes = 2 * TB * (D0p + out_dim) * x.dtype.itemsize
    est = ((1 if single_buffer_params else 2) * param_bytes
           + io_bytes + (2 << 20))
    vmem_limit = (None if est <= _VMEM_SOFT_DEFAULT
                  else min(int(est * 1.25), _VMEM_CAP))

    return pl.pallas_call(
        functools.partial(_fused_mlp_kernel, true_dims=true_dims),
        out_shape=jax.ShapeDtypeStruct((B, out_dim), x.dtype),
        grid=grid,
        in_specs=in_specs,
        out_specs=out_specs,
        compiler_params=pltpu.CompilerParams(
            dimension_semantics=("parallel",),     # shards batch grid on v7x
            vmem_limit_bytes=vmem_limit),
    )(x, *flat_params)


_BUFFERED1_SUPPORTED = [True]   # flipped off if pl.Buffered(1) is rejected


def make_forward(params, block_batch=512):
    """Pack/pad parameters ONCE (init time) and return a fast forward fn."""
    flat, true_dims, out_dim = pack_params(params)

    def forward(x):
        if _BUFFERED1_SUPPORTED[0]:
            try:
                return _fused_forward(
                    x, flat, true_dims=true_dims, out_dim=out_dim,
                    block_batch=block_batch, single_buffer_params=True)
            except Exception:   # older JAX without pipeline_mode / Buffered(1)
                _BUFFERED1_SUPPORTED[0] = False
        return _fused_forward(
            x, flat, true_dims=true_dims, out_dim=out_dim,
            block_batch=block_batch, single_buffer_params=False)

    return forward


# ---------------------------------------------------------------------------
# Init + reference
# ---------------------------------------------------------------------------
def init_params(key, output_size, hidden_sizes):
    """Deterministic synthetic init (PyTorch-style uniform fan-in bounds)."""
    params = {"blocks": [], "final": None}
    for i in range(len(hidden_sizes) - 1):
        din, dout = hidden_sizes[i], hidden_sizes[i + 1]
        key, kw, kb = jax.random.split(key, 3)
        bound = 1.0 / jnp.sqrt(din)
        w = jax.random.uniform(kw, (din, dout), jnp.float32, -bound, bound)
        b = jax.random.uniform(kb, (1, dout), jnp.float32, -bound, bound)
        gamma = jnp.ones((1, dout), jnp.float32)
        beta = jnp.zeros((1, dout), jnp.float32)
        params["blocks"].append((w, b, gamma, beta))
    din, dout = hidden_sizes[-1], output_size
    key, kw, kb = jax.random.split(key, 3)
    bound = 1.0 / jnp.sqrt(din)
    w = jax.random.uniform(kw, (din, dout), jnp.float32, -bound, bound)
    b = jax.random.uniform(kb, (1, dout), jnp.float32, -bound, bound)
    params["final"] = (w, b)
    return params


def _reference(x, params):
    """Pure-JAX reference using the same bf16-matmul / f32-LN recipe."""
    h = x
    for (w, b, g, beta) in params["blocks"]:
        y = jnp.dot(h.astype(jnp.bfloat16), w.astype(jnp.bfloat16),
                    preferred_element_type=jnp.float32) + b
        y = jnp.maximum(y, 0.0)
        mean = jnp.mean(y, axis=-1, keepdims=True)
        var = jnp.mean((y - mean) ** 2, axis=-1, keepdims=True)
        h = (y - mean) * lax.rsqrt(var + _LN_EPS) * g + beta
    w, b = params["final"]
    return jnp.dot(h.astype(jnp.bfloat16), w.astype(jnp.bfloat16),
                   preferred_element_type=jnp.float32) + b


if __name__ == "__main__":
    key = jax.random.PRNGKey(0)
    batch = 8
    hidden_sizes = (32, 64, 32)
    output_size = 16

    key, kx, kp = jax.random.split(key, 3)
    x = jax.random.normal(kx, (batch, hidden_sizes[0]), jnp.float32)
    params = init_params(kp, output_size, hidden_sizes)

    forward = make_forward(params)            # parameter packing happens once
    out = jax.block_until_ready(forward(x))
    out2 = jax.block_until_ready(forward(x))  # second call: pure jit-cache hit

    ref = _reference(x, params)
    assert out.shape == (batch, output_size), out.shape
    assert jnp.allclose(out, ref, atol=2e-2, rtol=2e-2), float(
        jnp.max(jnp.abs(out - ref)))
    assert jnp.array_equal(out, out2)

    print("KERNEL_OK")
</pallas_src>

<mosaic_0001>
module attributes {stable_mosaic.version = 11 : i64} {
  func.func @_fused_mlp_kernel(%arg0: i32, %arg1: memref<8x128xf32, #tpu.memory_space<vmem>>, %arg2: memref<128x128xbf16, #tpu.memory_space<vmem>>, %arg3: memref<1x128xf32, #tpu.memory_space<vmem>>, %arg4: memref<1x128xf32, #tpu.memory_space<vmem>>, %arg5: memref<1x128xf32, #tpu.memory_space<vmem>>, %arg6: memref<128x128xbf16, #tpu.memory_space<vmem>>, %arg7: memref<1x128xf32, #tpu.memory_space<vmem>>, %arg8: memref<1x128xf32, #tpu.memory_space<vmem>>, %arg9: memref<1x128xf32, #tpu.memory_space<vmem>>, %arg10: memref<128x128xbf16, #tpu.memory_space<vmem>>, %arg11: memref<1x128xf32, #tpu.memory_space<vmem>>, %arg12: memref<8x16xf32, #tpu.memory_space<vmem>>) attributes {dimension_semantics = [#tpu.dimension_semantics<parallel>], iteration_bounds = array<i64: 1>, scalar_prefetch = 0 : i64, scratch_operands = 0 : i64, tpu.core_type = #tpu.core_type<tc>, window_params = [{transform_indices = @transform_0, window_bounds = array<i64: 8, 128>}, {pipeline_mode = #tpu.pipeline_mode<synchronous>, transform_indices = @transform_1, window_bounds = array<i64: 128, 128>}, {pipeline_mode = #tpu.pipeline_mode<synchronous>, transform_indices = @transform_2, window_bounds = array<i64: 1, 128>}, {pipeline_mode = #tpu.pipeline_mode<synchronous>, transform_indices = @transform_3, window_bounds = array<i64: 1, 128>}, {pipeline_mode = #tpu.pipeline_mode<synchronous>, transform_indices = @transform_4, window_bounds = array<i64: 1, 128>}, {pipeline_mode = #tpu.pipeline_mode<synchronous>, transform_indices = @transform_5, window_bounds = array<i64: 128, 128>}, {pipeline_mode = #tpu.pipeline_mode<synchronous>, transform_indices = @transform_6, window_bounds = array<i64: 1, 128>}, {pipeline_mode = #tpu.pipeline_mode<synchronous>, transform_indices = @transform_7, window_bounds = array<i64: 1, 128>}, {pipeline_mode = #tpu.pipeline_mode<synchronous>, transform_indices = @transform_8, window_bounds = array<i64: 1, 128>}, {pipeline_mode = #tpu.pipeline_mode<synchronous>, transform_indices = @transform_9, window_bounds = array<i64: 128, 128>}, {pipeline_mode = #tpu.pipeline_mode<synchronous>, transform_indices = @transform_10, window_bounds = array<i64: 1, 128>}, {transform_indices = @transform_11, window_bounds = array<i64: 8, 16>}]} {
    %c0 = arith.constant 0 : index
    %c0_0 = arith.constant 0 : index
    %0 = vector.load %arg1[%c0, %c0_0] : memref<8x128xf32, #tpu.memory_space<vmem>>, vector<8x128xf32>
    %1 = arith.truncf %0 : vector<8x128xf32> to vector<8x128xbf16>
    %c0_1 = arith.constant 0 : index
    %c0_2 = arith.constant 0 : index
    %2 = vector.load %arg2[%c0_1, %c0_2] : memref<128x128xbf16, #tpu.memory_space<vmem>>, vector<128x128xbf16>
    %cst = arith.constant dense<0.000000e+00> : vector<8x128xf32>
    %3 = tpu.matmul %1, %2, %cst {dimension_numbers = #tpu.dot_dimension_numbers<[1], [0], [0], [1], [0, 0, 1, 1], [], []>} : vector<8x128xbf16>, vector<128x128xbf16>, vector<8x128xf32> -> vector<8x128xf32>
    %c0_3 = arith.constant 0 : index
    %c0_4 = arith.constant 0 : index
    %4 = vector.load %arg3[%c0_3, %c0_4] : memref<1x128xf32, #tpu.memory_space<vmem>>, vector<1x128xf32>
    %5 = vector.broadcast %4 : vector<1x128xf32> to vector<8x128xf32>
    %6 = arith.addf %3, %5 : vector<8x128xf32>
    %cst_5 = arith.constant 0.000000e+00 : f32
    %7 = vector.broadcast %cst_5 : f32 to vector<8x128xf32>
    %8 = arith.maximumf %6, %7 : vector<8x128xf32>
    %cst_6 = arith.constant dense<0.000000e+00> : vector<8xf32>
    %9 = vector.multi_reduction <add>, %8, %cst_6 [1] : vector<8x128xf32> to vector<8xf32>
    %10 = vector.shape_cast %9 : vector<8xf32> to vector<8x1xf32>
    %cst_7 = arith.constant 1.562500e-02 : f32
    %11 = vector.broadcast %cst_7 : f32 to vector<8x1xf32>
    %12 = arith.mulf %10, %11 : vector<8x1xf32>
    %13 = vector.broadcast %12 : vector<8x1xf32> to vector<8x128xf32>
    %14 = arith.subf %8, %13 : vector<8x128xf32>
    %15 = arith.mulf %14, %14 : vector<8x128xf32>
    %cst_8 = arith.constant dense<0.000000e+00> : vector<8xf32>
    %16 = vector.multi_reduction <add>, %15, %cst_8 [1] : vector<8x128xf32> to vector<8xf32>
    %17 = vector.shape_cast %16 : vector<8xf32> to vector<8x1xf32>
    %cst_9 = arith.constant 6.400000e+01 : f32
    %18 = vector.broadcast %cst_9 : f32 to vector<8x1xf32>
    %19 = arith.mulf %18, %12 : vector<8x1xf32>
    %20 = arith.mulf %19, %12 : vector<8x1xf32>
    %21 = arith.subf %17, %20 : vector<8x1xf32>
    %cst_10 = arith.constant 1.562500e-02 : f32
    %22 = vector.broadcast %cst_10 : f32 to vector<8x1xf32>
    %23 = arith.mulf %21, %22 : vector<8x1xf32>
    %cst_11 = arith.constant 9.99999974E-6 : f32
    %24 = vector.broadcast %cst_11 : f32 to vector<8x1xf32>
    %25 = arith.addf %23, %24 : vector<8x1xf32>
    %26 = math.rsqrt %25 : vector<8x1xf32>
    %27 = vector.broadcast %26 : vector<8x1xf32> to vector<8x128xf32>
    %28 = arith.mulf %14, %27 : vector<8x128xf32>
    %c0_12 = arith.constant 0 : index
    %c0_13 = arith.constant 0 : index
    %29 = vector.load %arg4[%c0_12, %c0_13] : memref<1x128xf32, #tpu.memory_space<vmem>>, vector<1x128xf32>
    %30 = vector.broadcast %29 : vector<1x128xf32> to vector<8x128xf32>
    %31 = arith.mulf %28, %30 : vector<8x128xf32>
    %c0_14 = arith.constant 0 : index
    %c0_15 = arith.constant 0 : index
    %32 = vector.load %arg5[%c0_14, %c0_15] : memref<1x128xf32, #tpu.memory_space<vmem>>, vector<1x128xf32>
    %33 = vector.broadcast %32 : vector<1x128xf32> to vector<8x128xf32>
    %34 = arith.addf %31, %33 : vector<8x128xf32>
    %35 = arith.truncf %34 : vector<8x128xf32> to vector<8x128xbf16>
    %c0_16 = arith.constant 0 : index
    %c0_17 = arith.constant 0 : index
    %36 = vector.load %arg6[%c0_16, %c0_17] : memref<128x128xbf16, #tpu.memory_space<vmem>>, vector<128x128xbf16>
    %cst_18 = arith.constant dense<0.000000e+00> : vector<8x128xf32>
    %37 = tpu.matmul %35, %36, %cst_18 {dimension_numbers = #tpu.dot_dimension_numbers<[1], [0], [0], [1], [0, 0, 1, 1], [], []>} : vector<8x128xbf16>, vector<128x128xbf16>, vector<8x128xf32> -> vector<8x128xf32>
    %c0_19 = arith.constant 0 : index
    %c0_20 = arith.constant 0 : index
    %38 = vector.load %arg7[%c0_19, %c0_20] : memref<1x128xf32, #tpu.memory_space<vmem>>, vector<1x128xf32>
    %39 = vector.broadcast %38 : vector<1x128xf32> to vector<8x128xf32>
    %40 = arith.addf %37, %39 : vector<8x128xf32>
    %cst_21 = arith.constant 0.000000e+00 : f32
    %41 = vector.broadcast %cst_21 : f32 to vector<8x128xf32>
    %42 = arith.maximumf %40, %41 : vector<8x128xf32>
    %cst_22 = arith.constant dense<0.000000e+00> : vector<8xf32>
    %43 = vector.multi_reduction <add>, %42, %cst_22 [1] : vector<8x128xf32> to vector<8xf32>
    %44 = vector.shape_cast %43 : vector<8xf32> to vector<8x1xf32>
    %cst_23 = arith.constant 3.125000e-02 : f32
    %45 = vector.broadcast %cst_23 : f32 to vector<8x1xf32>
    %46 = arith.mulf %44, %45 : vector<8x1xf32>
    %47 = vector.broadcast %46 : vector<8x1xf32> to vector<8x128xf32>
    %48 = arith.subf %42, %47 : vector<8x128xf32>
    %49 = arith.mulf %48, %48 : vector<8x128xf32>
    %cst_24 = arith.constant dense<0.000000e+00> : vector<8xf32>
    %50 = vector.multi_reduction <add>, %49, %cst_24 [1] : vector<8x128xf32> to vector<8xf32>
    %51 = vector.shape_cast %50 : vector<8xf32> to vector<8x1xf32>
    %cst_25 = arith.constant 9.600000e+01 : f32
    %52 = vector.broadcast %cst_25 : f32 to vector<8x1xf32>
    %53 = arith.mulf %52, %46 : vector<8x1xf32>
    %54 = arith.mulf %53, %46 : vector<8x1xf32>
    %55 = arith.subf %51, %54 : vector<8x1xf32>
    %cst_26 = arith.constant 3.125000e-02 : f32
    %56 = vector.broadcast %cst_26 : f32 to vector<8x1xf32>
    %57 = arith.mulf %55, %56 : vector<8x1xf32>
    %cst_27 = arith.constant 9.99999974E-6 : f32
    %58 = vector.broadcast %cst_27 : f32 to vector<8x1xf32>
    %59 = arith.addf %57, %58 : vector<8x1xf32>
    %60 = math.rsqrt %59 : vector<8x1xf32>
    %61 = vector.broadcast %60 : vector<8x1xf32> to vector<8x128xf32>
    %62 = arith.mulf %48, %61 : vector<8x128xf32>
    %c0_28 = arith.constant 0 : index
    %c0_29 = arith.constant 0 : index
    %63 = vector.load %arg8[%c0_28, %c0_29] : memref<1x128xf32, #tpu.memory_space<vmem>>, vector<1x128xf32>
    %64 = vector.broadcast %63 : vector<1x128xf32> to vector<8x128xf32>
    %65 = arith.mulf %62, %64 : vector<8x128xf32>
    %c0_30 = arith.constant 0 : index
    %c0_31 = arith.constant 0 : index
    %66 = vector.load %arg9[%c0_30, %c0_31] : memref<1x128xf32, #tpu.memory_space<vmem>>, vector<1x128xf32>
    %67 = vector.broadcast %66 : vector<1x128xf32> to vector<8x128xf32>
    %68 = arith.addf %65, %67 : vector<8x128xf32>
    %69 = arith.truncf %68 : vector<8x128xf32> to vector<8x128xbf16>
    %c0_32 = arith.constant 0 : index
    %c0_33 = arith.constant 0 : index
    %70 = vector.load %arg10[%c0_32, %c0_33] : memref<128x128xbf16, #tpu.memory_space<vmem>>, vector<128x128xbf16>
    %cst_34 = arith.constant dense<0.000000e+00> : vector<8x128xf32>
    %71 = tpu.matmul %69, %70, %cst_34 {dimension_numbers = #tpu.dot_dimension_numbers<[1], [0], [0], [1], [0, 0, 1, 1], [], []>} : vector<8x128xbf16>, vector<128x128xbf16>, vector<8x128xf32> -> vector<8x128xf32>
    %c0_35 = arith.constant 0 : index
    %c0_36 = arith.constant 0 : index
    %72 = vector.load %arg11[%c0_35, %c0_36] : memref<1x128xf32, #tpu.memory_space<vmem>>, vector<1x128xf32>
    %73 = vector.broadcast %72 : vector<1x128xf32> to vector<8x128xf32>
    %74 = arith.addf %71, %73 : vector<8x128xf32>
    %75 = vector.extract_strided_slice %74 {offsets = [0, 0], sizes = [8, 16], strides = [1, 1]} : vector<8x128xf32> to vector<8x16xf32>
    %c0_37 = arith.constant 0 : index
    %c0_38 = arith.constant 0 : index
    %76 = vector.load %arg12[%c0_37, %c0_38] : memref<8x16xf32, #tpu.memory_space<vmem>>, vector<8x16xf32>
    tpu.vector_store %arg12[%c0_37, %c0_38], %75 {strides = array<i32>} : memref<8x16xf32, #tpu.memory_space<vmem>>, vector<8x16xf32>,
    return
  }
  func.func @transform_0(%arg0: i32) -> (i32, i32) {
    %c0_i32 = arith.constant 0 : i32
    %c0_i32_0 = arith.constant 0 : i32
    return %arg0, %c0_i32 : i32, i32
  }
  func.func @transform_1(%arg0: i32) -> (i32, i32) {
    %c0_i32 = arith.constant 0 : i32
    %c0_i32_0 = arith.constant 0 : i32
    %c0_i32_1 = arith.constant 0 : i32
    return %c0_i32, %c0_i32_0 : i32, i32
  }
  func.func @transform_2(%arg0: i32) -> (i32, i32) {
    %c0_i32 = arith.constant 0 : i32
    %c0_i32_0 = arith.constant 0 : i32
    %c0_i32_1 = arith.constant 0 : i32
    return %c0_i32, %c0_i32_0 : i32, i32
  }
  func.func @transform_3(%arg0: i32) -> (i32, i32) {
    %c0_i32 = arith.constant 0 : i32
    %c0_i32_0 = arith.constant 0 : i32
    %c0_i32_1 = arith.constant 0 : i32
    return %c0_i32, %c0_i32_0 : i32, i32
  }
  func.func @transform_4(%arg0: i32) -> (i32, i32) {
    %c0_i32 = arith.constant 0 : i32
    %c0_i32_0 = arith.constant 0 : i32
    %c0_i32_1 = arith.constant 0 : i32
    return %c0_i32, %c0_i32_0 : i32, i32
  }
  func.func @transform_5(%arg0: i32) -> (i32, i32) {
    %c0_i32 = arith.constant 0 : i32
    %c0_i32_0 = arith.constant 0 : i32
    %c0_i32_1 = arith.constant 0 : i32
    return %c0_i32, %c0_i32_0 : i32, i32
  }
  func.func @transform_6(%arg0: i32) -> (i32, i32) {
    %c0_i32 = arith.constant 0 : i32
    %c0_i32_0 = arith.constant 0 : i32
    %c0_i32_1 = arith.constant 0 : i32
    return %c0_i32, %c0_i32_0 : i32, i32
  }
  func.func @transform_7(%arg0: i32) -> (i32, i32) {
    %c0_i32 = arith.constant 0 : i32
    %c0_i32_0 = arith.constant 0 : i32
    %c0_i32_1 = arith.constant 0 : i32
    return %c0_i32, %c0_i32_0 : i32, i32
  }
  func.func @transform_8(%arg0: i32) -> (i32, i32) {
    %c0_i32 = arith.constant 0 : i32
    %c0_i32_0 = arith.constant 0 : i32
    %c0_i32_1 = arith.constant 0 : i32
    return %c0_i32, %c0_i32_0 : i32, i32
  }
  func.func @transform_9(%arg0: i32) -> (i32, i32) {
    %c0_i32 = arith.constant 0 : i32
    %c0_i32_0 = arith.constant 0 : i32
    %c0_i32_1 = arith.constant 0 : i32
    return %c0_i32, %c0_i32_0 : i32, i32
  }
  func.func @transform_10(%arg0: i32) -> (i32, i32) {
    %c0_i32 = arith.constant 0 : i32
    %c0_i32_0 = arith.constant 0 : i32
    %c0_i32_1 = arith.constant 0 : i32
    return %c0_i32, %c0_i32_0 : i32, i32
  }
  func.func @transform_11(%arg0: i32) -> (i32, i32) {
    %c0_i32 = arith.constant 0 : i32
    %c0_i32_0 = arith.constant 0 : i32
    return %arg0, %c0_i32 : i32, i32
  }
}

module attributes {stable_mosaic.version = 11 : i64} {
  func.func @_fused_mlp_kernel(%arg0: i32, %arg1: memref<8x128xf32, #tpu.memory_space<vmem>>, %arg2: memref<128x128xbf16, #tpu.memory_space<vmem>>, %arg3: memref<1x128xf32, #tpu.memory_space<vmem>>, %arg4: memref<1x128xf32, #tpu.memory_space<vmem>>, %arg5: memref<1x128xf32, #tpu.memory_space<vmem>>, %arg6: memref<128x128xbf16, #tpu.memory_space<vmem>>, %arg7: memref<1x128xf32, #tpu.memory_space<vmem>>, %arg8: memref<1x128xf32, #tpu.memory_space<vmem>>, %arg9: memref<1x128xf32, #tpu.memory_space<vmem>>, %arg10: memref<128x128xbf16, #tpu.memory_space<vmem>>, %arg11: memref<1x128xf32, #tpu.memory_space<vmem>>, %arg12: memref<8x16xf32, #tpu.memory_space<vmem>>) attributes {dimension_semantics = [#tpu.dimension_semantics<parallel>], iteration_bounds = array<i64: 1>, scalar_prefetch = 0 : i64, scratch_operands = 0 : i64, tpu.core_type = #tpu.core_type<tc>, window_params = [{transform_indices = @transform_0, window_bounds = array<i64: 8, 128>}, {pipeline_mode = #tpu.pipeline_mode<synchronous>, transform_indices = @transform_1, window_bounds = array<i64: 128, 128>}, {pipeline_mode = #tpu.pipeline_mode<synchronous>, transform_indices = @transform_2, window_bounds = array<i64: 1, 128>}, {pipeline_mode = #tpu.pipeline_mode<synchronous>, transform_indices = @transform_3, window_bounds = array<i64: 1, 128>}, {pipeline_mode = #tpu.pipeline_mode<synchronous>, transform_indices = @transform_4, window_bounds = array<i64: 1, 128>}, {pipeline_mode = #tpu.pipeline_mode<synchronous>, transform_indices = @transform_5, window_bounds = array<i64: 128, 128>}, {pipeline_mode = #tpu.pipeline_mode<synchronous>, transform_indices = @transform_6, window_bounds = array<i64: 1, 128>}, {pipeline_mode = #tpu.pipeline_mode<synchronous>, transform_indices = @transform_7, window_bounds = array<i64: 1, 128>}, {pipeline_mode = #tpu.pipeline_mode<synchronous>, transform_indices = @transform_8, window_bounds = array<i64: 1, 128>}, {pipeline_mode = #tpu.pipeline_mode<synchronous>, transform_indices = @transform_9, window_bounds = array<i64: 128, 128>}, {pipeline_mode = #tpu.pipeline_mode<synchronous>, transform_indices = @transform_10, window_bounds = array<i64: 1, 128>}, {transform_indices = @transform_11, window_bounds = array<i64: 8, 16>}]} {
    %c0 = arith.constant 0 : index
    %c0_0 = arith.constant 0 : index
    %0 = vector.load %arg1[%c0, %c0_0] : memref<8x128xf32, #tpu.memory_space<vmem>>, vector<8x128xf32>
    %1 = arith.truncf %0 : vector<8x128xf32> to vector<8x128xbf16>
    %c0_1 = arith.constant 0 : index
    %c0_2 = arith.constant 0 : index
    %2 = vector.load %arg2[%c0_1, %c0_2] : memref<128x128xbf16, #tpu.memory_space<vmem>>, vector<128x128xbf16>
    %cst = arith.constant dense<0.000000e+00> : vector<8x128xf32>
    %3 = tpu.matmul %1, %2, %cst {dimension_numbers = #tpu.dot_dimension_numbers<[1], [0], [0], [1], [0, 0, 1, 1], [], []>} : vector<8x128xbf16>, vector<128x128xbf16>, vector<8x128xf32> -> vector<8x128xf32>
    %c0_3 = arith.constant 0 : index
    %c0_4 = arith.constant 0 : index
    %4 = vector.load %arg3[%c0_3, %c0_4] : memref<1x128xf32, #tpu.memory_space<vmem>>, vector<1x128xf32>
    %5 = vector.broadcast %4 : vector<1x128xf32> to vector<8x128xf32>
    %6 = arith.addf %3, %5 : vector<8x128xf32>
    %cst_5 = arith.constant 0.000000e+00 : f32
    %7 = vector.broadcast %cst_5 : f32 to vector<8x128xf32>
    %8 = arith.maximumf %6, %7 : vector<8x128xf32>
    %cst_6 = arith.constant dense<0.000000e+00> : vector<8xf32>
    %9 = vector.multi_reduction <add>, %8, %cst_6 [1] : vector<8x128xf32> to vector<8xf32>
    %10 = vector.shape_cast %9 : vector<8xf32> to vector<8x1xf32>
    %cst_7 = arith.constant 1.562500e-02 : f32
    %11 = vector.broadcast %cst_7 : f32 to vector<8x1xf32>
    %12 = arith.mulf %10, %11 : vector<8x1xf32>
    %13 = vector.broadcast %12 : vector<8x1xf32> to vector<8x128xf32>
    %14 = arith.subf %8, %13 : vector<8x128xf32>
    %15 = arith.mulf %14, %14 : vector<8x128xf32>
    %cst_8 = arith.constant dense<0.000000e+00> : vector<8xf32>
    %16 = vector.multi_reduction <add>, %15, %cst_8 [1] : vector<8x128xf32> to vector<8xf32>
    %17 = vector.shape_cast %16 : vector<8xf32> to vector<8x1xf32>
    %cst_9 = arith.constant 6.400000e+01 : f32
    %18 = vector.broadcast %cst_9 : f32 to vector<8x1xf32>
    %19 = arith.mulf %18, %12 : vector<8x1xf32>
    %20 = arith.mulf %19, %12 : vector<8x1xf32>
    %21 = arith.subf %17, %20 : vector<8x1xf32>
    %cst_10 = arith.constant 1.562500e-02 : f32
    %22 = vector.broadcast %cst_10 : f32 to vector<8x1xf32>
    %23 = arith.mulf %21, %22 : vector<8x1xf32>
    %cst_11 = arith.constant 9.99999974E-6 : f32
    %24 = vector.broadcast %cst_11 : f32 to vector<8x1xf32>
    %25 = arith.addf %23, %24 : vector<8x1xf32>
    %26 = math.rsqrt %25 : vector<8x1xf32>
    %27 = vector.broadcast %26 : vector<8x1xf32> to vector<8x128xf32>
    %28 = arith.mulf %14, %27 : vector<8x128xf32>
    %c0_12 = arith.constant 0 : index
    %c0_13 = arith.constant 0 : index
    %29 = vector.load %arg4[%c0_12, %c0_13] : memref<1x128xf32, #tpu.memory_space<vmem>>, vector<1x128xf32>
    %30 = vector.broadcast %29 : vector<1x128xf32> to vector<8x128xf32>
    %31 = arith.mulf %28, %30 : vector<8x128xf32>
    %c0_14 = arith.constant 0 : index
    %c0_15 = arith.constant 0 : index
    %32 = vector.load %arg5[%c0_14, %c0_15] : memref<1x128xf32, #tpu.memory_space<vmem>>, vector<1x128xf32>
    %33 = vector.broadcast %32 : vector<1x128xf32> to vector<8x128xf32>
    %34 = arith.addf %31, %33 : vector<8x128xf32>
    %35 = arith.truncf %34 : vector<8x128xf32> to vector<8x128xbf16>
    %c0_16 = arith.constant 0 : index
    %c0_17 = arith.constant 0 : index
    %36 = vector.load %arg6[%c0_16, %c0_17] : memref<128x128xbf16, #tpu.memory_space<vmem>>, vector<128x128xbf16>
    %cst_18 = arith.constant dense<0.000000e+00> : vector<8x128xf32>
    %37 = tpu.matmul %35, %36, %cst_18 {dimension_numbers = #tpu.dot_dimension_numbers<[1], [0], [0], [1], [0, 0, 1, 1], [], []>} : vector<8x128xbf16>, vector<128x128xbf16>, vector<8x128xf32> -> vector<8x128xf32>
    %c0_19 = arith.constant 0 : index
    %c0_20 = arith.constant 0 : index
    %38 = vector.load %arg7[%c0_19, %c0_20] : memref<1x128xf32, #tpu.memory_space<vmem>>, vector<1x128xf32>
    %39 = vector.broadcast %38 : vector<1x128xf32> to vector<8x128xf32>
    %40 = arith.addf %37, %39 : vector<8x128xf32>
    %cst_21 = arith.constant 0.000000e+00 : f32
    %41 = vector.broadcast %cst_21 : f32 to vector<8x128xf32>
    %42 = arith.maximumf %40, %41 : vector<8x128xf32>
    %cst_22 = arith.constant dense<0.000000e+00> : vector<8xf32>
    %43 = vector.multi_reduction <add>, %42, %cst_22 [1] : vector<8x128xf32> to vector<8xf32>
    %44 = vector.shape_cast %43 : vector<8xf32> to vector<8x1xf32>
    %cst_23 = arith.constant 3.125000e-02 : f32
    %45 = vector.broadcast %cst_23 : f32 to vector<8x1xf32>
    %46 = arith.mulf %44, %45 : vector<8x1xf32>
    %47 = vector.broadcast %46 : vector<8x1xf32> to vector<8x128xf32>
    %48 = arith.subf %42, %47 : vector<8x128xf32>
    %49 = arith.mulf %48, %48 : vector<8x128xf32>
    %cst_24 = arith.constant dense<0.000000e+00> : vector<8xf32>
    %50 = vector.multi_reduction <add>, %49, %cst_24 [1] : vector<8x128xf32> to vector<8xf32>
    %51 = vector.shape_cast %50 : vector<8xf32> to vector<8x1xf32>
    %cst_25 = arith.constant 9.600000e+01 : f32
    %52 = vector.broadcast %cst_25 : f32 to vector<8x1xf32>
    %53 = arith.mulf %52, %46 : vector<8x1xf32>
    %54 = arith.mulf %53, %46 : vector<8x1xf32>
    %55 = arith.subf %51, %54 : vector<8x1xf32>
    %cst_26 = arith.constant 3.125000e-02 : f32
    %56 = vector.broadcast %cst_26 : f32 to vector<8x1xf32>
    %57 = arith.mulf %55, %56 : vector<8x1xf32>
    %cst_27 = arith.constant 9.99999974E-6 : f32
    %58 = vector.broadcast %cst_27 : f32 to vector<8x1xf32>
    %59 = arith.addf %57, %58 : vector<8x1xf32>
    %60 = math.rsqrt %59 : vector<8x1xf32>
    %61 = vector.broadcast %60 : vector<8x1xf32> to vector<8x128xf32>
    %62 = arith.mulf %48, %61 : vector<8x128xf32>
    %c0_28 = arith.constant 0 : index
    %c0_29 = arith.constant 0 : index
    %63 = vector.load %arg8[%c0_28, %c0_29] : memref<1x128xf32, #tpu.memory_space<vmem>>, vector<1x128xf32>
    %64 = vector.broadcast %63 : vector<1x128xf32> to vector<8x128xf32>
    %65 = arith.mulf %62, %64 : vector<8x128xf32>
    %c0_30 = arith.constant 0 : index
    %c0_31 = arith.constant 0 : index
    %66 = vector.load %arg9[%c0_30, %c0_31] : memref<1x128xf32, #tpu.memory_space<vmem>>, vector<1x128xf32>
    %67 = vector.broadcast %66 : vector<1x128xf32> to vector<8x128xf32>
    %68 = arith.addf %65, %67 : vector<8x128xf32>
    %69 = arith.truncf %68 : vector<8x128xf32> to vector<8x128xbf16>
    %c0_32 = arith.constant 0 : index
    %c0_33 = arith.constant 0 : index
    %70 = vector.load %arg10[%c0_32, %c0_33] : memref<128x128xbf16, #tpu.memory_space<vmem>>, vector<128x128xbf16>
    %cst_34 = arith.constant dense<0.000000e+00> : vector<8x128xf32>
    %71 = tpu.matmul %69, %70, %cst_34 {dimension_numbers = #tpu.dot_dimension_numbers<[1], [0], [0], [1], [0, 0, 1, 1], [], []>} : vector<8x128xbf16>, vector<128x128xbf16>, vector<8x128xf32> -> vector<8x128xf32>
    %c0_35 = arith.constant 0 : index
    %c0_36 = arith.constant 0 : index
    %72 = vector.load %arg11[%c0_35, %c0_36] : memref<1x128xf32, #tpu.memory_space<vmem>>, vector<1x128xf32>
    %73 = vector.broadcast %72 : vector<1x128xf32> to vector<8x128xf32>
    %74 = arith.addf %71, %73 : vector<8x128xf32>
    %75 = vector.extract_strided_slice %74 {offsets = [0, 0], sizes = [8, 16], strides = [1, 1]} : vector<8x128xf32> to vector<8x16xf32>
    %c0_37 = arith.constant 0 : index
    %c0_38 = arith.constant 0 : index
    %76 = vector.load %arg12[%c0_37, %c0_38] : memref<8x16xf32, #tpu.memory_space<vmem>>, vector<8x16xf32>
    tpu.vector_store %arg12[%c0_37, %c0_38], %75 {strides = array<i32>} : memref<8x16xf32, #tpu.memory_space<vmem>>, vector<8x16xf32>,
    return
  }
  func.func @transform_0(%arg0: i32) -> (i32, i32) {
    %c0_i32 = arith.constant 0 : i32
    %c0_i32_0 = arith.constant 0 : i32
    return %arg0, %c0_i32 : i32, i32
  }
  func.func @transform_1(%arg0: i32) -> (i32, i32) {
    %c0_i32 = arith.constant 0 : i32
    %c0_i32_0 = arith.constant 0 : i32
    %c0_i32_1 = arith.constant 0 : i32
    return %c0_i32, %c0_i32_0 : i32, i32
  }
  func.func @transform_2(%arg0: i32) -> (i32, i32) {
    %c0_i32 = arith.constant 0 : i32
    %c0_i32_0 = arith.constant 0 : i32
    %c0_i32_1 = arith.constant 0 : i32
    return %c0_i32, %c0_i32_0 : i32, i32
  }
  func.func @transform_3(%arg0: i32) -> (i32, i32) {
    %c0_i32 = arith.constant 0 : i32
    %c0_i32_0 = arith.constant 0 : i32
    %c0_i32_1 = arith.constant 0 : i32
    return %c0_i32, %c0_i32_0 : i32, i32
  }
  func.func @transform_4(%arg0: i32) -> (i32, i32) {
    %c0_i32 = arith.constant 0 : i32
    %c0_i32_0 = arith.constant 0 : i32
    %c0_i32_1 = arith.constant 0 : i32
    return %c0_i32, %c0_i32_0 : i32, i32
  }
  func.func @transform_5(%arg0: i32) -> (i32, i32) {
    %c0_i32 = arith.constant 0 : i32
    %c0_i32_0 = arith.constant 0 : i32
    %c0_i32_1 = arith.constant 0 : i32
    return %c0_i32, %c0_i32_0 : i32, i32
  }
  func.func @transform_6(%arg0: i32) -> (i32, i32) {
    %c0_i32 = arith.constant 0 : i32
    %c0_i32_0 = arith.constant 0 : i32
    %c0_i32_1 = arith.constant 0 : i32
    return %c0_i32, %c0_i32_0 : i32, i32
  }
  func.func @transform_7(%arg0: i32) -> (i32, i32) {
    %c0_i32 = arith.constant 0 : i32
    %c0_i32_0 = arith.constant 0 : i32
    %c0_i32_1 = arith.constant 0 : i32
    return %c0_i32, %c0_i32_0 : i32, i32
  }
  func.func @transform_8(%arg0: i32) -> (i32, i32) {
    %c0_i32 = arith.constant 0 : i32
    %c0_i32_0 = arith.constant 0 : i32
    %c0_i32_1 = arith.constant 0 : i32
    return %c0_i32, %c0_i32_0 : i32, i32
  }
  func.func @transform_9(%arg0: i32) -> (i32, i32) {
    %c0_i32 = arith.constant 0 : i32
    %c0_i32_0 = arith.constant 0 : i32
    %c0_i32_1 = arith.constant 0 : i32
    return %c0_i32, %c0_i32_0 : i32, i32
  }
  func.func @transform_10(%arg0: i32) -> (i32, i32) {
    %c0_i32 = arith.constant 0 : i32
    %c0_i32_0 = arith.constant 0 : i32
    %c0_i32_1 = arith.constant 0 : i32
    return %c0_i32, %c0_i32_0 : i32, i32
  }
  func.func @transform_11(%arg0: i32) -> (i32, i32) {
    %c0_i32 = arith.constant 0 : i32
    %c0_i32_0 = arith.constant 0 : i32
    return %arg0, %c0_i32 : i32, i32
  }
}

</mosaic_0001>

<llo_original>
// kernel: _fused_forward.1
$region0: #{_fused_forward.1}
  #allocation0 [shape = 'u32[]', space=smem, size = 0x4, offset = 0x4, fixed_abs, tag = 'smem constant byte address 0x4 - core index']
  #allocation1 [shape = 'u32[144,128]{1,0:T(1,128)}', space=vmem, size = 0x12000, scoped, tag = 'internal scratch']
  %s0 = inlined_call_operand.vmem [shape: f32[8,128], index: 0, kind: input, shape index: {}]
  %s1 = inlined_call_operand.hbm [shape: bf16[128,128], index: 1, kind: input, shape index: {}]
  %s2 = inlined_call_operand.vmem [shape: f32[1,128], index: 2, kind: input, shape index: {}]
  %s3 = inlined_call_operand.vmem [shape: f32[1,128], index: 3, kind: input, shape index: {}]
  %s4 = inlined_call_operand.vmem [shape: f32[1,128], index: 4, kind: input, shape index: {}]
  %s5 = inlined_call_operand.hbm [shape: bf16[128,128], index: 5, kind: input, shape index: {}]
  %s6 = inlined_call_operand.vmem [shape: f32[1,128], index: 6, kind: input, shape index: {}]
  %s7 = inlined_call_operand.vmem [shape: f32[1,128], index: 7, kind: input, shape index: {}]
  %s8 = inlined_call_operand.vmem [shape: f32[1,128], index: 8, kind: input, shape index: {}]
  %s9 = inlined_call_operand.hbm [shape: bf16[128,128], index: 9, kind: input, shape index: {}]
  %s10 = inlined_call_operand.vmem [shape: f32[1,128], index: 10, kind: input, shape index: {}]
  %s11 = inlined_call_operand.hbm [shape: f32[8,16], index: 11, kind: output, shape index: {}]
  %s12 = sld [smem:[#allocation0]]
  $region66: #{_fused_forward.1} parent=0
    _
  %s14 = ssub.s32 1, %s12
  %s15 = scalar_select 0, %s14, %s12
  $region1: #{_fused_forward.1} parent=0
    #allocation2 [shape = 'u8[32768]{0}', space=vmem, size = 0x8000, scoped, tag = 'input window, operand 1, single buffered']
    #allocation3 [shape = 's32[1]{0}', space=sflag, size = 0x4, scoped, tag = 'scoped memory for _fused_forward.1']
    #allocation4 [shape = 's32[1]{0}', space=sflag, size = 0x4, scoped, tag = 'scoped memory for _fused_forward.1']
    #allocation5 [shape = 'u8[32768]{0}', space=vmem, size = 0x8000, scoped, tag = 'input window, operand 5, single buffered']
    #allocation6 [shape = 's32[1]{0}', space=sflag, size = 0x4, scoped, tag = 'scoped memory for _fused_forward.1']
    #allocation7 [shape = 'u8[32768]{0}', space=vmem, size = 0x8000, scoped, tag = 'input window, operand 9, single buffered']
    #allocation8 [shape = 'u8[4096]{0}', space=vmem, size = 0x1000, scoped, tag = 'output window, operand 0, single buffered']
    %16 = vsyncpa [#allocation3], 0
    %17 = vsyncpa [#allocation6], 0
    %18 = vsyncpa [#allocation4], 0
    // Predicated region
    $region2: #{_fused_forward.1} parent=1 // pred_check
      _
    $region3: #{_fused_forward.1} parent=1 // pred_check_branch
      %20 = sbr.rel (0) target = $region5
    $region4: #{_fused_forward.1} parent=1 // pred_region
      _
    $region5: #{_fused_forward.1} parent=1 // pred_fallthru
      _
    // Predicated region
    $region6: #{_fused_forward.1} parent=1 // pred_check
      _
    $region7: #{_fused_forward.1} parent=1 // pred_check_branch
      %22 = sbr.rel (0) target = $region9
    $region8: #{_fused_forward.1} parent=1 // pred_region
      %s24 = ssub.s32 1024, 1024
      %25 = vsyncadd [#allocation3], %s24
      %s26 = sshll.u32 [#allocation2], 4
      %s27 = int_to_ptr.vmem [resolvable:$true] %s26
      %32 = dma.hbm_to_vmem [thread:$0]  %s1, 1024, %s27, [#allocation3], 64, 64, 4
    $region9: #{_fused_forward.1} parent=1 // pred_fallthru
      _
    // Predicated region
    $region10: #{_fused_forward.1} parent=1 // pred_check
      _
    $region11: #{_fused_forward.1} parent=1 // pred_check_branch
      %34 = sbr.rel (0) target = $region13
    $region12: #{_fused_forward.1} parent=1 // pred_region
      _
    $region13: #{_fused_forward.1} parent=1 // pred_fallthru
      _
    // Predicated region
    $region14: #{_fused_forward.1} parent=1 // pred_check
      _
    $region15: #{_fused_forward.1} parent=1 // pred_check_branch
      %36 = sbr.rel (0) target = $region17
    $region16: #{_fused_forward.1} parent=1 // pred_region
      _
    $region17: #{_fused_forward.1} parent=1 // pred_fallthru
      _
    // Predicated region
    $region18: #{_fused_forward.1} parent=1 // pred_check
      _
    $region19: #{_fused_forward.1} parent=1 // pred_check_branch
      %38 = sbr.rel (0) target = $region21
    $region20: #{_fused_forward.1} parent=1 // pred_region
      _
    $region21: #{_fused_forward.1} parent=1 // pred_fallthru
      _
    // Predicated region
    $region22: #{_fused_forward.1} parent=1 // pred_check
      _
    $region23: #{_fused_forward.1} parent=1 // pred_check_branch
      %40 = sbr.rel (0) target = $region25
    $region24: #{_fused_forward.1} parent=1 // pred_region
      %s42 = ssub.s32 1024, 1024
      %43 = vsyncadd [#allocation6], %s42
      %s44 = sshll.u32 [#allocation5], 4
      %s45 = int_to_ptr.vmem [resolvable:$true] %s44
      %50 = dma.hbm_to_vmem [thread:$0]  %s5, 1024, %s45, [#allocation6], 64, 64, 4
    $region25: #{_fused_forward.1} parent=1 // pred_fallthru
      _
    // Predicated region
    $region26: #{_fused_forward.1} parent=1 // pred_check
      _
    $region27: #{_fused_forward.1} parent=1 // pred_check_branch
      %52 = sbr.rel (0) target = $region29
    $region28: #{_fused_forward.1} parent=1 // pred_region
      _
    $region29: #{_fused_forward.1} parent=1 // pred_fallthru
      _
    // Predicated region
    $region30: #{_fused_forward.1} parent=1 // pred_check
      _
    $region31: #{_fused_forward.1} parent=1 // pred_check_branch
      %54 = sbr.rel (0) target = $region33
    $region32: #{_fused_forward.1} parent=1 // pred_region
      _
    $region33: #{_fused_forward.1} parent=1 // pred_fallthru
      _
    // Predicated region
    $region34: #{_fused_forward.1} parent=1 // pred_check
      _
    $region35: #{_fused_forward.1} parent=1 // pred_check_branch
      %56 = sbr.rel (0) target = $region37
    $region36: #{_fused_forward.1} parent=1 // pred_region
      _
    $region37: #{_fused_forward.1} parent=1 // pred_fallthru
      _
    // Predicated region
    $region38: #{_fused_forward.1} parent=1 // pred_check
      _
    $region39: #{_fused_forward.1} parent=1 // pred_check_branch
      %58 = sbr.rel (0) target = $region41
    $region40: #{_fused_forward.1} parent=1 // pred_region
      %s60 = ssub.s32 1024, 1024
      %61 = vsyncadd [#allocation6], %s60
      %s62 = sshll.u32 [#allocation7], 4
      %s63 = int_to_ptr.vmem [resolvable:$true] %s62
      %68 = dma.hbm_to_vmem [thread:$0]  %s9, 1024, %s63, [#allocation6], 64, 64, 4
    $region41: #{_fused_forward.1} parent=1 // pred_fallthru
      _
    // Predicated region
    $region42: #{_fused_forward.1} parent=1 // pred_check
      _
    $region43: #{_fused_forward.1} parent=1 // pred_check_branch
      %70 = sbr.rel (0) target = $region45
    $region44: #{_fused_forward.1} parent=1 // pred_region
      _
    $region45: #{_fused_forward.1} parent=1 // pred_fallthru
      _
    // Predicated region
    $region46: #{_fused_forward.1} parent=1 // pred_check
      _
    $region47: #{_fused_forward.1} parent=1 // pred_check_branch
      %72 = sbr.rel (0) target = $region49
    $region48: #{_fused_forward.1} parent=1 // pred_region
      %73 = dma.done [#allocation3], 1024
    $region49: #{_fused_forward.1} parent=1 // pred_fallthru
      _
    // Predicated region
    $region50: #{_fused_forward.1} parent=1 // pred_check
      _
    $region51: #{_fused_forward.1} parent=1 // pred_check_branch
      %75 = sbr.rel (0) target = $region53
    $region52: #{_fused_forward.1} parent=1 // pred_region
      %76 = dma.done [#allocation6], 1024
    $region53: #{_fused_forward.1} parent=1 // pred_fallthru
      _
    // Predicated region
    $region54: #{_fused_forward.1} parent=1 // pred_check
      _
    $region55: #{_fused_forward.1} parent=1 // pred_check_branch
      %78 = sbr.rel (0) target = $region57
    $region56: #{_fused_forward.1} parent=1 // pred_region
      %79 = dma.done [#allocation6], 1024
    $region57: #{_fused_forward.1} parent=1 // pred_fallthru
      _
    %v81 = vld [vmem:[%s0] sm:$0xff]
    %v82 = vpack.c.bf16 %v81, %v81
    %v83 = vld [vmem:[#allocation2] sm:$0xf]
    %v84 = vld [vmem:[#allocation2 + $0x4] sm:$0xf]
    %v85 = vld [vmem:[#allocation2 + $0x8] sm:$0xf]
    %v86 = vld [vmem:[#allocation2 + $0xc] sm:$0xf]
    %v87 = vld [vmem:[#allocation2 + $0x10] sm:$0xf]
    %v88 = vld [vmem:[#allocation2 + $0x14] sm:$0xf]
    %v89 = vld [vmem:[#allocation2 + $0x18] sm:$0xf]
    %v90 = vld [vmem:[#allocation2 + $0x1c] sm:$0xf]
    %v91 = vld [vmem:[#allocation2 + $0x20] sm:$0xf]
    %v92 = vld [vmem:[#allocation2 + $0x24] sm:$0xf]
    %v93 = vld [vmem:[#allocation2 + $0x28] sm:$0xf]
    %v94 = vld [vmem:[#allocation2 + $0x2c] sm:$0xf]
    %v95 = vld [vmem:[#allocation2 + $0x30] sm:$0xf]
    %v96 = vld [vmem:[#allocation2 + $0x34] sm:$0xf]
    %v97 = vld [vmem:[#allocation2 + $0x38] sm:$0xf]
    %v98 = vld [vmem:[#allocation2 + $0x3c] sm:$0xf]
    %v99 = vld [vmem:[%s2] sm:$0x1]
    %v101 = vlaneseq
    %v102 = vshrl.u32 %v101, 7
    %v103 = vsub.s32 0, %v102
    %v104 = vrot.slane %v99, %v103
    %v122 = vunpack.c.l.b16 %v83
    %v123 = vunpack.c.l.b16 %v84
    %v124 = vunpack.c.l.b16 %v85
    %v125 = vunpack.c.l.b16 %v86
    %v126 = vunpack.c.l.b16 %v87
    %v127 = vunpack.c.l.b16 %v88
    %v128 = vunpack.c.l.b16 %v89
    %v129 = vunpack.c.l.b16 %v90
    %v130 = vunpack.c.l.b16 %v91
    %v131 = vunpack.c.l.b16 %v92
    %v132 = vunpack.c.l.b16 %v93
    %v133 = vunpack.c.l.b16 %v94
    %v134 = vunpack.c.l.b16 %v95
    %v135 = vunpack.c.l.b16 %v96
    %v136 = vunpack.c.l.b16 %v97
    %v137 = vunpack.c.l.b16 %v98
    %v138 = vpack.c.b16 %v123, %v122
    %v139 = vpack.c.b16 %v125, %v124
    %v140 = vpack.c.b16 %v127, %v126
    %v141 = vpack.c.b16 %v129, %v128
    %v142 = vpack.c.b16 %v131, %v130
    %v143 = vpack.c.b16 %v133, %v132
    %v144 = vpack.c.b16 %v135, %v134
    %v145 = vpack.c.b16 %v137, %v136
    %154 = vmatprep.subr.bf16.mxu0 0
    %155 = vmatpush1.bf16.msra.mxu0 %v138
    %156 = vmatprep.subr.bf16.mxu0 0
    %157 = vmatpush1.bf16.msra.mxu0 %v139
    %158 = vmatprep.subr.bf16.mxu0 0
    %159 = vmatpush1.bf16.msra.mxu0 %v140
    %160 = vmatprep.subr.bf16.mxu0 0
    %161 = vmatpush1.bf16.msra.mxu0 %v141
    %162 = vmatprep.subr.bf16.mxu0 0
    %163 = vmatpush1.bf16.msra.mxu0 %v142
    %164 = vmatprep.subr.bf16.mxu0 0
    %165 = vmatpush1.bf16.msra.mxu0 %v143
    %166 = vmatprep.subr.bf16.mxu0 0
    %167 = vmatpush1.bf16.msra.mxu0 %v144
    %168 = vmatprep.subr.bf16.mxu0 0
    %169 = vmatpush1.bf16.msra.mxu0 %v145
    %170 = vmatprep.subr.bf16.mxu0 0
    %171 = vmatpush1.bf16.msra.mxu0 0
    %172 = vmatprep.subr.bf16.mxu0 0
    %173 = vmatpush1.bf16.msra.mxu0 0
    %174 = vmatprep.subr.bf16.mxu0 0
    %175 = vmatpush1.bf16.msra.mxu0 0
    %176 = vmatprep.subr.bf16.mxu0 0
    %177 = vmatpush1.bf16.msra.mxu0 0
    %178 = vmatprep.subr.bf16.mxu0 0
    %179 = vmatpush1.bf16.msra.mxu0 0
    %180 = vmatprep.subr.bf16.mxu0 0
    %181 = vmatpush1.bf16.msra.mxu0 0
    %182 = vmatprep.subr.bf16.mxu0 0
    %183 = vmatpush1.bf16.msra.mxu0 0
    %184 = vmatprep.subr.bf16.mxu0 0
    %185 = vmatpush1.bf16.msra.mxu0 0
    %186 = vmatprep.mubr.bf16.mxu0 0
    %187 = vmatmul.mubr.bf16.gmra.mrb[0].mxu0 %v82
    %v188 = vpop.f32.mrb[0].mxu0
    %v189 = vadd.f32 %v104, %v188
    %v190 = vpop.f32.mrb[0].mxu0
    %v191 = vpop.f32.mrb[0].mxu0
    %v192 = vpop.f32.mrb[0].mxu0
    %193 = vdwg.mxu0
    %v194 = vmax.f32 %v189, 0.0
    %195 = vadd.xlane.f32.xlu0 %v194
    %v196 = vpop.xlane.xlu0 %195
    %v197 = vmul.f32 %v196, 0.015625
    %v198 = vsub.f32 %v194, %v197
    %v199 = vmul.f32 %v198, %v198
    %200 = vadd.xlane.f32.xlu0 %v199
    %v201 = vpop.xlane.xlu0 %200
    %v202 = vmul.f32 %v197, 64.0
    %v203 = vmul.f32 %v202, %v197
    %v204 = vsub.f32 %v201, %v203
    %v205 = vmul.f32 %v204, 0.015625
    %v206 = vadd.f32 %v205, 1e-05
    %v207 = vrsqrt.pop %v206
    %v208 = vmul.f32 %v198, %v207
    %v209 = vld [vmem:[%s3] sm:$0x1]
    %v211 = vlaneseq
    %v212 = vshrl.u32 %v211, 7
    %v213 = vsub.s32 0, %v212
    %v214 = vrot.slane %v209, %v213
    %v216 = vmul.f32 %v208, %v214
    %v217 = vld [vmem:[%s4] sm:$0x1]
    %v219 = vlaneseq
    %v220 = vshrl.u32 %v219, 7
    %v221 = vsub.s32 0, %v220
    %v222 = vrot.slane %v217, %v221
    %v224 = vadd.f32 %v216, %v222
    %v225 = vpack.c.bf16 %v224, %v224
    %v226 = vld [vmem:[#allocation5] sm:$0xf]
    %v227 = vld [vmem:[#allocation5 + $0x4] sm:$0xf]
    %v228 = vld [vmem:[#allocation5 + $0x8] sm:$0xf]
    %v229 = vld [vmem:[#allocation5 + $0xc] sm:$0xf]
    %v230 = vld [vmem:[#allocation5 + $0x10] sm:$0xf]
    %v231 = vld [vmem:[#allocation5 + $0x14] sm:$0xf]
    %v232 = vld [vmem:[#allocation5 + $0x18] sm:$0xf]
    %v233 = vld [vmem:[#allocation5 + $0x1c] sm:$0xf]
    %v234 = vld [vmem:[#allocation5 + $0x20] sm:$0xf]
    %v235 = vld [vmem:[#allocation5 + $0x24] sm:$0xf]
    %v236 = vld [vmem:[#allocation5 + $0x28] sm:$0xf]
    %v237 = vld [vmem:[#allocation5 + $0x2c] sm:$0xf]
    %v238 = vld [vmem:[#allocation5 + $0x30] sm:$0xf]
    %v239 = vld [vmem:[#allocation5 + $0x34] sm:$0xf]
    %v240 = vld [vmem:[#allocation5 + $0x38] sm:$0xf]
    %v241 = vld [vmem:[#allocation5 + $0x3c] sm:$0xf]
    %v242 = vld [vmem:[%s6] sm:$0x1]
    %v244 = vlaneseq
    %v245 = vshrl.u32 %v244, 7
    %v246 = vsub.s32 0, %v245
    %v247 = vrot.slane %v242, %v246
    %v265 = vunpack.c.l.b16 %v226
    %v266 = vunpack.c.l.b16 %v227
    %v267 = vunpack.c.l.b16 %v228
    %v268 = vunpack.c.l.b16 %v229
    %v269 = vunpack.c.l.b16 %v230
    %v270 = vunpack.c.l.b16 %v231
    %v271 = vunpack.c.l.b16 %v232
    %v272 = vunpack.c.l.b16 %v233
    %v273 = vunpack.c.l.b16 %v234
    %v274 = vunpack.c.l.b16 %v235
    %v275 = vunpack.c.l.b16 %v236
    %v276 = vunpack.c.l.b16 %v237
    %v277 = vunpack.c.l.b16 %v238
    %v278 = vunpack.c.l.b16 %v239
    %v279 = vunpack.c.l.b16 %v240
    %v280 = vunpack.c.l.b16 %v241
    %v281 = vpack.c.b16 %v266, %v265
    %v282 = vpack.c.b16 %v268, %v267
    %v283 = vpack.c.b16 %v270, %v269
    %v284 = vpack.c.b16 %v272, %v271
    %v285 = vpack.c.b16 %v274, %v273
    %v286 = vpack.c.b16 %v276, %v275
    %v287 = vpack.c.b16 %v278, %v277
    %v288 = vpack.c.b16 %v280, %v279
    %297 = vmatprep.subr.bf16.mxu0 0
    %298 = vmatpush1.bf16.msra.mxu0 %v281
    %299 = vmatprep.subr.bf16.mxu0 0
    %300 = vmatpush1.bf16.msra.mxu0 %v282
    %301 = vmatprep.subr.bf16.mxu0 0
    %302 = vmatpush1.bf16.msra.mxu0 %v283
    %303 = vmatprep.subr.bf16.mxu0 0
    %304 = vmatpush1.bf16.msra.mxu0 %v284
    %305 = vmatprep.subr.bf16.mxu0 0
    %306 = vmatpush1.bf16.msra.mxu0 %v285
    %307 = vmatprep.subr.bf16.mxu0 0
    %308 = vmatpush1.bf16.msra.mxu0 %v286
    %309 = vmatprep.subr.bf16.mxu0 0
    %310 = vmatpush1.bf16.msra.mxu0 %v287
    %311 = vmatprep.subr.bf16.mxu0 0
    %312 = vmatpush1.bf16.msra.mxu0 %v288
    %313 = vmatprep.subr.bf16.mxu0 0
    %314 = vmatpush1.bf16.msra.mxu0 0
    %315 = vmatprep.subr.bf16.mxu0 0
    %316 = vmatpush1.bf16.msra.mxu0 0
    %317 = vmatprep.subr.bf16.mxu0 0
    %318 = vmatpush1.bf16.msra.mxu0 0
    %319 = vmatprep.subr.bf16.mxu0 0
    %320 = vmatpush1.bf16.msra.mxu0 0
    %321 = vmatprep.subr.bf16.mxu0 0
    %322 = vmatpush1.bf16.msra.mxu0 0
    %323 = vmatprep.subr.bf16.mxu0 0
    %324 = vmatpush1.bf16.msra.mxu0 0
    %325 = vmatprep.subr.bf16.mxu0 0
    %326 = vmatpush1.bf16.msra.mxu0 0
    %327 = vmatprep.subr.bf16.mxu0 0
    %328 = vmatpush1.bf16.msra.mxu0 0
    %329 = vmatprep.mubr.bf16.mxu0 0
    %330 = vmatmul.mubr.bf16.gmra.mrb[0].mxu0 %v225
    %v331 = vpop.f32.mrb[0].mxu0
    %v332 = vadd.f32 %v247, %v331
    %v333 = vpop.f32.mrb[0].mxu0
    %v334 = vpop.f32.mrb[0].mxu0
    %v335 = vpop.f32.mrb[0].mxu0
    %336 = vdwg.mxu0
    %v337 = vmax.f32 %v332, 0.0
    %338 = vadd.xlane.f32.xlu0 %v337
    %v339 = vpop.xlane.xlu0 %338
    %v340 = vmul.f32 %v339, 0.03125
    %v341 = vsub.f32 %v337, %v340
    %v342 = vmul.f32 %v341, %v341
    %343 = vadd.xlane.f32.xlu0 %v342
    %v344 = vpop.xlane.xlu0 %343
    %v345 = vmul.f32 %v340, 96.0
    %v346 = vmul.f32 %v345, %v340
    %v347 = vsub.f32 %v344, %v346
    %v348 = vmul.f32 %v347, 0.03125
    %v349 = vadd.f32 %v348, 1e-05
    %v350 = vrsqrt.pop %v349
    %v351 = vmul.f32 %v341, %v350
    %v352 = vld [vmem:[%s7] sm:$0x1]
    %v354 = vlaneseq
    %v355 = vshrl.u32 %v354, 7
    %v356 = vsub.s32 0, %v355
    %v357 = vrot.slane %v352, %v356
    %v359 = vmul.f32 %v351, %v357
    %v360 = vld [vmem:[%s8] sm:$0x1]
    %v362 = vlaneseq
    %v363 = vshrl.u32 %v362, 7
    %v364 = vsub.s32 0, %v363
    %v365 = vrot.slane %v360, %v364
    %v367 = vadd.f32 %v359, %v365
    %v368 = vpack.c.bf16 %v367, %v367
    %v369 = vld [vmem:[#allocation7] sm:$0xf]
    %v370 = vld [vmem:[#allocation7 + $0x4] sm:$0xf]
    %v371 = vld [vmem:[#allocation7 + $0x8] sm:$0xf]
    %v372 = vld [vmem:[#allocation7 + $0xc] sm:$0xf]
    %v373 = vld [vmem:[#allocation7 + $0x10] sm:$0xf]
    %v374 = vld [vmem:[#allocation7 + $0x14] sm:$0xf]
    %v375 = vld [vmem:[#allocation7 + $0x18] sm:$0xf]
    %v376 = vld [vmem:[#allocation7 + $0x1c] sm:$0xf]
    %v377 = vld [vmem:[#allocation7 + $0x20] sm:$0xf]
    %v378 = vld [vmem:[#allocation7 + $0x24] sm:$0xf]
    %v379 = vld [vmem:[#allocation7 + $0x28] sm:$0xf]
    %v380 = vld [vmem:[#allocation7 + $0x2c] sm:$0xf]
    %v381 = vld [vmem:[#allocation7 + $0x30] sm:$0xf]
    %v382 = vld [vmem:[#allocation7 + $0x34] sm:$0xf]
    %v383 = vld [vmem:[#allocation7 + $0x38] sm:$0xf]
    %v384 = vld [vmem:[#allocation7 + $0x3c] sm:$0xf]
    %v385 = vld [vmem:[%s10] sm:$0x1]
    %v387 = vlaneseq
    %v388 = vshrl.u32 %v387, 7
    %v389 = vsub.s32 0, %v388
    %v390 = vrot.slane %v385, %v389
    %v408 = vunpack.c.l.b16 %v369
    %v409 = vunpack.c.l.b16 %v370
    %v410 = vunpack.c.l.b16 %v371
    %v411 = vunpack.c.l.b16 %v372
    %v412 = vunpack.c.l.b16 %v373
    %v413 = vunpack.c.l.b16 %v374
    %v414 = vunpack.c.l.b16 %v375
    %v415 = vunpack.c.l.b16 %v376
    %v416 = vunpack.c.l.b16 %v377
    %v417 = vunpack.c.l.b16 %v378
    %v418 = vunpack.c.l.b16 %v379
    %v419 = vunpack.c.l.b16 %v380
    %v420 = vunpack.c.l.b16 %v381
    %v421 = vunpack.c.l.b16 %v382
    %v422 = vunpack.c.l.b16 %v383
    %v423 = vunpack.c.l.b16 %v384
    %v424 = vpack.c.b16 %v409, %v408
    %v425 = vpack.c.b16 %v411, %v410
    %v426 = vpack.c.b16 %v413, %v412
    %v427 = vpack.c.b16 %v415, %v414
    %v428 = vpack.c.b16 %v417, %v416
    %v429 = vpack.c.b16 %v419, %v418
    %v430 = vpack.c.b16 %v421, %v420
    %v431 = vpack.c.b16 %v423, %v422
    %440 = vmatprep.subr.bf16.mxu0 0
    %441 = vmatpush1.bf16.msra.mxu0 %v424
    %442 = vmatprep.subr.bf16.mxu0 0
    %443 = vmatpush1.bf16.msra.mxu0 %v425
    %444 = vmatprep.subr.bf16.mxu0 0
    %445 = vmatpush1.bf16.msra.mxu0 %v426
    %446 = vmatprep.subr.bf16.mxu0 0
    %447 = vmatpush1.bf16.msra.mxu0 %v427
    %448 = vmatprep.subr.bf16.mxu0 0
    %449 = vmatpush1.bf16.msra.mxu0 %v428
    %450 = vmatprep.subr.bf16.mxu0 0
    %451 = vmatpush1.bf16.msra.mxu0 %v429
    %452 = vmatprep.subr.bf16.mxu0 0
    %453 = vmatpush1.bf16.msra.mxu0 %v430
    %454 = vmatprep.subr.bf16.mxu0 0
    %455 = vmatpush1.bf16.msra.mxu0 %v431
    %456 = vmatprep.subr.bf16.mxu0 0
    %457 = vmatpush1.bf16.msra.mxu0 0
    %458 = vmatprep.subr.bf16.mxu0 0
    %459 = vmatpush1.bf16.msra.mxu0 0
    %460 = vmatprep.subr.bf16.mxu0 0
    %461 = vmatpush1.bf16.msra.mxu0 0
    %462 = vmatprep.subr.bf16.mxu0 0
    %463 = vmatpush1.bf16.msra.mxu0 0
    %464 = vmatprep.subr.bf16.mxu0 0
    %465 = vmatpush1.bf16.msra.mxu0 0
    %466 = vmatprep.subr.bf16.mxu0 0
    %467 = vmatpush1.bf16.msra.mxu0 0
    %468 = vmatprep.subr.bf16.mxu0 0
    %469 = vmatpush1.bf16.msra.mxu0 0
    %470 = vmatprep.subr.bf16.mxu0 0
    %471 = vmatpush1.bf16.msra.mxu0 0
    %472 = vmatprep.mubr.bf16.mxu0 0
    %473 = vmatmul.mubr.bf16.gmra.mrb[0].mxu0 %v368
    %v474 = vpop.f32.mrb[0].mxu0
    %v475 = vadd.f32 %v390, %v474
    %v476 = vpop.f32.mrb[0].mxu0
    %v477 = vpop.f32.mrb[0].mxu0
    %v478 = vpop.f32.mrb[0].mxu0
    %479 = vdwg.mxu0
    %vm480 = vcmask 130048
    %481 = vst.msk [vmem:[#allocation8] sm:$0xff] %vm480, %v475
    // Predicated region
    $region58: #{_fused_forward.1} parent=1 // pred_check
      _
    $region59: #{_fused_forward.1} parent=1 // pred_check_branch
      %483 = sbr.rel (0) target = $region61
    $region60: #{_fused_forward.1} parent=1 // pred_region
      %s485 = ssub.s32 128, 128
      %486 = vsyncadd [#allocation4], %s485
      %s488 = sshll.u32 [#allocation8], 4
      %s489 = int_to_ptr.vmem [resolvable:$true] %s488
      %491 = dma.vmem_to_hbm [thread:$0]  %s489, 128, %s11, [#allocation4]
    $region61: #{_fused_forward.1} parent=1 // pred_fallthru
      _
    // Predicated region
    $region62: #{_fused_forward.1} parent=1 // pred_check
      _
    $region63: #{_fused_forward.1} parent=1 // pred_check_branch
      %493 = sbr.rel (0) target = $region65
    $region64: #{_fused_forward.1} parent=1 // pred_region
      %494 = dma.done [#allocation4], 128
    $region65: #{_fused_forward.1} parent=1 // pred_fallthru
      _
    %495 = vsyncpa [#allocation3], 1
    %496 = vsyncpa [#allocation6], 1
    %497 = vsyncpa [#allocation4], 1

// kernel: _fused_forward.1
$region0: #{_fused_forward.1}
  #allocation0 [shape = 'u32[]', space=smem, size = 0x4, offset = 0x4, fixed_abs, tag = 'smem constant byte address 0x4 - core index']
  #allocation1 [shape = 'u32[144,128]{1,0:T(1,128)}', space=vmem, size = 0x12000, scoped, tag = 'internal scratch']
  %s0 = inlined_call_operand.vmem [shape: f32[8,128], index: 0, kind: input, shape index: {}]
  %s1 = inlined_call_operand.hbm [shape: bf16[128,128], index: 1, kind: input, shape index: {}]
  %s2 = inlined_call_operand.vmem [shape: f32[1,128], index: 2, kind: input, shape index: {}]
  %s3 = inlined_call_operand.vmem [shape: f32[1,128], index: 3, kind: input, shape index: {}]
  %s4 = inlined_call_operand.vmem [shape: f32[1,128], index: 4, kind: input, shape index: {}]
  %s5 = inlined_call_operand.hbm [shape: bf16[128,128], index: 5, kind: input, shape index: {}]
  %s6 = inlined_call_operand.vmem [shape: f32[1,128], index: 6, kind: input, shape index: {}]
  %s7 = inlined_call_operand.vmem [shape: f32[1,128], index: 7, kind: input, shape index: {}]
  %s8 = inlined_call_operand.vmem [shape: f32[1,128], index: 8, kind: input, shape index: {}]
  %s9 = inlined_call_operand.hbm [shape: bf16[128,128], index: 9, kind: input, shape index: {}]
  %s10 = inlined_call_operand.vmem [shape: f32[1,128], index: 10, kind: input, shape index: {}]
  %s11 = inlined_call_operand.hbm [shape: f32[8,16], index: 11, kind: output, shape index: {}]
  %s12 = sld [smem:[#allocation0]]
  $region66: #{_fused_forward.1} parent=0
    _
  %s14 = ssub.s32 1, %s12
  %s15 = scalar_select 0, %s14, %s12
  $region1: #{_fused_forward.1} parent=0
    #allocation2 [shape = 'u8[32768]{0}', space=vmem, size = 0x8000, scoped, tag = 'input window, operand 1, single buffered']
    #allocation3 [shape = 's32[1]{0}', space=sflag, size = 0x4, scoped, tag = 'scoped memory for _fused_forward.1']
    #allocation4 [shape = 's32[1]{0}', space=sflag, size = 0x4, scoped, tag = 'scoped memory for _fused_forward.1']
    #allocation5 [shape = 'u8[32768]{0}', space=vmem, size = 0x8000, scoped, tag = 'input window, operand 5, single buffered']
    #allocation6 [shape = 's32[1]{0}', space=sflag, size = 0x4, scoped, tag = 'scoped memory for _fused_forward.1']
    #allocation7 [shape = 'u8[32768]{0}', space=vmem, size = 0x8000, scoped, tag = 'input window, operand 9, single buffered']
    #allocation8 [shape = 'u8[4096]{0}', space=vmem, size = 0x1000, scoped, tag = 'output window, operand 0, single buffered']
    %16 = vsyncpa [#allocation3], 0
    %17 = vsyncpa [#allocation6], 0
    %18 = vsyncpa [#allocation4], 0
    // Predicated region
    $region2: #{_fused_forward.1} parent=1 // pred_check
      _
    $region3: #{_fused_forward.1} parent=1 // pred_check_branch
      %20 = sbr.rel (0) target = $region5
    $region4: #{_fused_forward.1} parent=1 // pred_region
      _
    $region5: #{_fused_forward.1} parent=1 // pred_fallthru
      _
    // Predicated region
    $region6: #{_fused_forward.1} parent=1 // pred_check
      _
    $region7: #{_fused_forward.1} parent=1 // pred_check_branch
      %22 = sbr.rel (0) target = $region9
    $region8: #{_fused_forward.1} parent=1 // pred_region
      %s24 = ssub.s32 1024, 1024
      %25 = vsyncadd [#allocation3], %s24
      %s26 = sshll.u32 [#allocation2], 4
      %s27 = int_to_ptr.vmem [resolvable:$true] %s26
      %32 = dma.hbm_to_vmem [thread:$0]  %s1, 1024, %s27, [#allocation3], 64, 64, 4
    $region9: #{_fused_forward.1} parent=1 // pred_fallthru
      _
    // Predicated region
    $region10: #{_fused_forward.1} parent=1 // pred_check
      _
    $region11: #{_fused_forward.1} parent=1 // pred_check_branch
      %34 = sbr.rel (0) target = $region13
    $region12: #{_fused_forward.1} parent=1 // pred_region
      _
    $region13: #{_fused_forward.1} parent=1 // pred_fallthru
      _
    // Predicated region
    $region14: #{_fused_forward.1} parent=1 // pred_check
      _
    $region15: #{_fused_forward.1} parent=1 // pred_check_branch
      %36 = sbr.rel (0) target = $region17
    $region16: #{_fused_forward.1} parent=1 // pred_region
      _
    $region17: #{_fused_forward.1} parent=1 // pred_fallthru
      _
    // Predicated region
    $region18: #{_fused_forward.1} parent=1 // pred_check
      _
    $region19: #{_fused_forward.1} parent=1 // pred_check_branch
      %38 = sbr.rel (0) target = $region21
    $region20: #{_fused_forward.1} parent=1 // pred_region
      _
    $region21: #{_fused_forward.1} parent=1 // pred_fallthru
      _
    // Predicated region
    $region22: #{_fused_forward.1} parent=1 // pred_check
      _
    $region23: #{_fused_forward.1} parent=1 // pred_check_branch
      %40 = sbr.rel (0) target = $region25
    $region24: #{_fused_forward.1} parent=1 // pred_region
      %s42 = ssub.s32 1024, 1024
      %43 = vsyncadd [#allocation6], %s42
      %s44 = sshll.u32 [#allocation5], 4
      %s45 = int_to_ptr.vmem [resolvable:$true] %s44
      %50 = dma.hbm_to_vmem [thread:$0]  %s5, 1024, %s45, [#allocation6], 64, 64, 4
    $region25: #{_fused_forward.1} parent=1 // pred_fallthru
      _
    // Predicated region
    $region26: #{_fused_forward.1} parent=1 // pred_check
      _
    $region27: #{_fused_forward.1} parent=1 // pred_check_branch
      %52 = sbr.rel (0) target = $region29
    $region28: #{_fused_forward.1} parent=1 // pred_region
      _
    $region29: #{_fused_forward.1} parent=1 // pred_fallthru
      _
    // Predicated region
    $region30: #{_fused_forward.1} parent=1 // pred_check
      _
    $region31: #{_fused_forward.1} parent=1 // pred_check_branch
      %54 = sbr.rel (0) target = $region33
    $region32: #{_fused_forward.1} parent=1 // pred_region
      _
    $region33: #{_fused_forward.1} parent=1 // pred_fallthru
      _
    // Predicated region
    $region34: #{_fused_forward.1} parent=1 // pred_check
      _
    $region35: #{_fused_forward.1} parent=1 // pred_check_branch
      %56 = sbr.rel (0) target = $region37
    $region36: #{_fused_forward.1} parent=1 // pred_region
      _
    $region37: #{_fused_forward.1} parent=1 // pred_fallthru
      _
    // Predicated region
    $region38: #{_fused_forward.1} parent=1 // pred_check
      _
    $region39: #{_fused_forward.1} parent=1 // pred_check_branch
      %58 = sbr.rel (0) target = $region41
    $region40: #{_fused_forward.1} parent=1 // pred_region
      %s60 = ssub.s32 1024, 1024
      %61 = vsyncadd [#allocation6], %s60
      %s62 = sshll.u32 [#allocation7], 4
      %s63 = int_to_ptr.vmem [resolvable:$true] %s62
      %68 = dma.hbm_to_vmem [thread:$0]  %s9, 1024, %s63, [#allocation6], 64, 64, 4
    $region41: #{_fused_forward.1} parent=1 // pred_fallthru
      _
    // Predicated region
    $region42: #{_fused_forward.1} parent=1 // pred_check
      _
    $region43: #{_fused_forward.1} parent=1 // pred_check_branch
      %70 = sbr.rel (0) target = $region45
    $region44: #{_fused_forward.1} parent=1 // pred_region
      _
    $region45: #{_fused_forward.1} parent=1 // pred_fallthru
      _
    // Predicated region
    $region46: #{_fused_forward.1} parent=1 // pred_check
      _
    $region47: #{_fused_forward.1} parent=1 // pred_check_branch
      %72 = sbr.rel (0) target = $region49
    $region48: #{_fused_forward.1} parent=1 // pred_region
      %73 = dma.done [#allocation3], 1024
    $region49: #{_fused_forward.1} parent=1 // pred_fallthru
      _
    // Predicated region
    $region50: #{_fused_forward.1} parent=1 // pred_check
      _
    $region51: #{_fused_forward.1} parent=1 // pred_check_branch
      %75 = sbr.rel (0) target = $region53
    $region52: #{_fused_forward.1} parent=1 // pred_region
      %76 = dma.done [#allocation6], 1024
    $region53: #{_fused_forward.1} parent=1 // pred_fallthru
      _
    // Predicated region
    $region54: #{_fused_forward.1} parent=1 // pred_check
      _
    $region55: #{_fused_forward.1} parent=1 // pred_check_branch
      %78 = sbr.rel (0) target = $region57
    $region56: #{_fused_forward.1} parent=1 // pred_region
      %79 = dma.done [#allocation6], 1024
    $region57: #{_fused_forward.1} parent=1 // pred_fallthru
      _
    %v81 = vld [vmem:[%s0] sm:$0xff]
    %v82 = vpack.c.bf16 %v81, %v81
    %v83 = vld [vmem:[#allocation2] sm:$0xf]
    %v84 = vld [vmem:[#allocation2 + $0x4] sm:$0xf]
    %v85 = vld [vmem:[#allocation2 + $0x8] sm:$0xf]
    %v86 = vld [vmem:[#allocation2 + $0xc] sm:$0xf]
    %v87 = vld [vmem:[#allocation2 + $0x10] sm:$0xf]
    %v88 = vld [vmem:[#allocation2 + $0x14] sm:$0xf]
    %v89 = vld [vmem:[#allocation2 + $0x18] sm:$0xf]
    %v90 = vld [vmem:[#allocation2 + $0x1c] sm:$0xf]
    %v91 = vld [vmem:[#allocation2 + $0x20] sm:$0xf]
    %v92 = vld [vmem:[#allocation2 + $0x24] sm:$0xf]
    %v93 = vld [vmem:[#allocation2 + $0x28] sm:$0xf]
    %v94 = vld [vmem:[#allocation2 + $0x2c] sm:$0xf]
    %v95 = vld [vmem:[#allocation2 + $0x30] sm:$0xf]
    %v96 = vld [vmem:[#allocation2 + $0x34] sm:$0xf]
    %v97 = vld [vmem:[#allocation2 + $0x38] sm:$0xf]
    %v98 = vld [vmem:[#allocation2 + $0x3c] sm:$0xf]
    %v99 = vld [vmem:[%s2] sm:$0x1]
    %v101 = vlaneseq
    %v102 = vshrl.u32 %v101, 7
    %v103 = vsub.s32 0, %v102
    %v104 = vrot.slane %v99, %v103
    %v122 = vunpack.c.l.b16 %v83
    %v123 = vunpack.c.l.b16 %v84
    %v124 = vunpack.c.l.b16 %v85
    %v125 = vunpack.c.l.b16 %v86
    %v126 = vunpack.c.l.b16 %v87
    %v127 = vunpack.c.l.b16 %v88
    %v128 = vunpack.c.l.b16 %v89
    %v129 = vunpack.c.l.b16 %v90
    %v130 = vunpack.c.l.b16 %v91
    %v131 = vunpack.c.l.b16 %v92
    %v132 = vunpack.c.l.b16 %v93
    %v133 = vunpack.c.l.b16 %v94
    %v134 = vunpack.c.l.b16 %v95
    %v135 = vunpack.c.l.b16 %v96
    %v136 = vunpack.c.l.b16 %v97
    %v137 = vunpack.c.l.b16 %v98
    %v138 = vpack.c.b16 %v123, %v122
    %v139 = vpack.c.b16 %v125, %v124
    %v140 = vpack.c.b16 %v127, %v126
    %v141 = vpack.c.b16 %v129, %v128
    %v142 = vpack.c.b16 %v131, %v130
    %v143 = vpack.c.b16 %v133, %v132
    %v144 = vpack.c.b16 %v135, %v134
    %v145 = vpack.c.b16 %v137, %v136
    %154 = vmatprep.subr.bf16.mxu0 0
    %155 = vmatpush1.bf16.msra.mxu0 %v138
    %156 = vmatprep.subr.bf16.mxu0 0
    %157 = vmatpush1.bf16.msra.mxu0 %v139
    %158 = vmatprep.subr.bf16.mxu0 0
    %159 = vmatpush1.bf16.msra.mxu0 %v140
    %160 = vmatprep.subr.bf16.mxu0 0
    %161 = vmatpush1.bf16.msra.mxu0 %v141
    %162 = vmatprep.subr.bf16.mxu0 0
    %163 = vmatpush1.bf16.msra.mxu0 %v142
    %164 = vmatprep.subr.bf16.mxu0 0
    %165 = vmatpush1.bf16.msra.mxu0 %v143
    %166 = vmatprep.subr.bf16.mxu0 0
    %167 = vmatpush1.bf16.msra.mxu0 %v144
    %168 = vmatprep.subr.bf16.mxu0 0
    %169 = vmatpush1.bf16.msra.mxu0 %v145
    %170 = vmatprep.subr.bf16.mxu0 0
    %171 = vmatpush1.bf16.msra.mxu0 0
    %172 = vmatprep.subr.bf16.mxu0 0
    %173 = vmatpush1.bf16.msra.mxu0 0
    %174 = vmatprep.subr.bf16.mxu0 0
    %175 = vmatpush1.bf16.msra.mxu0 0
    %176 = vmatprep.subr.bf16.mxu0 0
    %177 = vmatpush1.bf16.msra.mxu0 0
    %178 = vmatprep.subr.bf16.mxu0 0
    %179 = vmatpush1.bf16.msra.mxu0 0
    %180 = vmatprep.subr.bf16.mxu0 0
    %181 = vmatpush1.bf16.msra.mxu0 0
    %182 = vmatprep.subr.bf16.mxu0 0
    %183 = vmatpush1.bf16.msra.mxu0 0
    %184 = vmatprep.subr.bf16.mxu0 0
    %185 = vmatpush1.bf16.msra.mxu0 0
    %186 = vmatprep.mubr.bf16.mxu0 0
    %187 = vmatmul.mubr.bf16.gmra.mrb[0].mxu0 %v82
    %v188 = vpop.f32.mrb[0].mxu0
    %v189 = vadd.f32 %v104, %v188
    %v190 = vpop.f32.mrb[0].mxu0
    %v191 = vpop.f32.mrb[0].mxu0
    %v192 = vpop.f32.mrb[0].mxu0
    %193 = vdwg.mxu0
    %v194 = vmax.f32 %v189, 0.0
    %195 = vadd.xlane.f32.xlu0 %v194
    %v196 = vpop.xlane.xlu0 %195
    %v197 = vmul.f32 %v196, 0.015625
    %v198 = vsub.f32 %v194, %v197
    %v199 = vmul.f32 %v198, %v198
    %200 = vadd.xlane.f32.xlu0 %v199
    %v201 = vpop.xlane.xlu0 %200
    %v202 = vmul.f32 %v197, 64.0
    %v203 = vmul.f32 %v202, %v197
    %v204 = vsub.f32 %v201, %v203
    %v205 = vmul.f32 %v204, 0.015625
    %v206 = vadd.f32 %v205, 1e-05
    %v207 = vrsqrt.pop %v206
    %v208 = vmul.f32 %v198, %v207
    %v209 = vld [vmem:[%s3] sm:$0x1]
    %v211 = vlaneseq
    %v212 = vshrl.u32 %v211, 7
    %v213 = vsub.s32 0, %v212
    %v214 = vrot.slane %v209, %v213
    %v216 = vmul.f32 %v208, %v214
    %v217 = vld [vmem:[%s4] sm:$0x1]
    %v219 = vlaneseq
    %v220 = vshrl.u32 %v219, 7
    %v221 = vsub.s32 0, %v220
    %v222 = vrot.slane %v217, %v221
    %v224 = vadd.f32 %v216, %v222
    %v225 = vpack.c.bf16 %v224, %v224
    %v226 = vld [vmem:[#allocation5] sm:$0xf]
    %v227 = vld [vmem:[#allocation5 + $0x4] sm:$0xf]
    %v228 = vld [vmem:[#allocation5 + $0x8] sm:$0xf]
    %v229 = vld [vmem:[#allocation5 + $0xc] sm:$0xf]
    %v230 = vld [vmem:[#allocation5 + $0x10] sm:$0xf]
    %v231 = vld [vmem:[#allocation5 + $0x14] sm:$0xf]
    %v232 = vld [vmem:[#allocation5 + $0x18] sm:$0xf]
    %v233 = vld [vmem:[#allocation5 + $0x1c] sm:$0xf]
    %v234 = vld [vmem:[#allocation5 + $0x20] sm:$0xf]
    %v235 = vld [vmem:[#allocation5 + $0x24] sm:$0xf]
    %v236 = vld [vmem:[#allocation5 + $0x28] sm:$0xf]
    %v237 = vld [vmem:[#allocation5 + $0x2c] sm:$0xf]
    %v238 = vld [vmem:[#allocation5 + $0x30] sm:$0xf]
    %v239 = vld [vmem:[#allocation5 + $0x34] sm:$0xf]
    %v240 = vld [vmem:[#allocation5 + $0x38] sm:$0xf]
    %v241 = vld [vmem:[#allocation5 + $0x3c] sm:$0xf]
    %v242 = vld [vmem:[%s6] sm:$0x1]
    %v244 = vlaneseq
    %v245 = vshrl.u32 %v244, 7
    %v246 = vsub.s32 0, %v245
    %v247 = vrot.slane %v242, %v246
    %v265 = vunpack.c.l.b16 %v226
    %v266 = vunpack.c.l.b16 %v227
    %v267 = vunpack.c.l.b16 %v228
    %v268 = vunpack.c.l.b16 %v229
    %v269 = vunpack.c.l.b16 %v230
    %v270 = vunpack.c.l.b16 %v231
    %v271 = vunpack.c.l.b16 %v232
    %v272 = vunpack.c.l.b16 %v233
    %v273 = vunpack.c.l.b16 %v234
    %v274 = vunpack.c.l.b16 %v235
    %v275 = vunpack.c.l.b16 %v236
    %v276 = vunpack.c.l.b16 %v237
    %v277 = vunpack.c.l.b16 %v238
    %v278 = vunpack.c.l.b16 %v239
    %v279 = vunpack.c.l.b16 %v240
    %v280 = vunpack.c.l.b16 %v241
    %v281 = vpack.c.b16 %v266, %v265
    %v282 = vpack.c.b16 %v268, %v267
    %v283 = vpack.c.b16 %v270, %v269
    %v284 = vpack.c.b16 %v272, %v271
    %v285 = vpack.c.b16 %v274, %v273
    %v286 = vpack.c.b16 %v276, %v275
    %v287 = vpack.c.b16 %v278, %v277
    %v288 = vpack.c.b16 %v280, %v279
    %297 = vmatprep.subr.bf16.mxu0 0
    %298 = vmatpush1.bf16.msra.mxu0 %v281
    %299 = vmatprep.subr.bf16.mxu0 0
    %300 = vmatpush1.bf16.msra.mxu0 %v282
    %301 = vmatprep.subr.bf16.mxu0 0
    %302 = vmatpush1.bf16.msra.mxu0 %v283
    %303 = vmatprep.subr.bf16.mxu0 0
    %304 = vmatpush1.bf16.msra.mxu0 %v284
    %305 = vmatprep.subr.bf16.mxu0 0
    %306 = vmatpush1.bf16.msra.mxu0 %v285
    %307 = vmatprep.subr.bf16.mxu0 0
    %308 = vmatpush1.bf16.msra.mxu0 %v286
    %309 = vmatprep.subr.bf16.mxu0 0
    %310 = vmatpush1.bf16.msra.mxu0 %v287
    %311 = vmatprep.subr.bf16.mxu0 0
    %312 = vmatpush1.bf16.msra.mxu0 %v288
    %313 = vmatprep.subr.bf16.mxu0 0
    %314 = vmatpush1.bf16.msra.mxu0 0
    %315 = vmatprep.subr.bf16.mxu0 0
    %316 = vmatpush1.bf16.msra.mxu0 0
    %317 = vmatprep.subr.bf16.mxu0 0
    %318 = vmatpush1.bf16.msra.mxu0 0
    %319 = vmatprep.subr.bf16.mxu0 0
    %320 = vmatpush1.bf16.msra.mxu0 0
    %321 = vmatprep.subr.bf16.mxu0 0
    %322 = vmatpush1.bf16.msra.mxu0 0
    %323 = vmatprep.subr.bf16.mxu0 0
    %324 = vmatpush1.bf16.msra.mxu0 0
    %325 = vmatprep.subr.bf16.mxu0 0
    %326 = vmatpush1.bf16.msra.mxu0 0
    %327 = vmatprep.subr.bf16.mxu0 0
    %328 = vmatpush1.bf16.msra.mxu0 0
    %329 = vmatprep.mubr.bf16.mxu0 0
    %330 = vmatmul.mubr.bf16.gmra.mrb[0].mxu0 %v225
    %v331 = vpop.f32.mrb[0].mxu0
    %v332 = vadd.f32 %v247, %v331
    %v333 = vpop.f32.mrb[0].mxu0
    %v334 = vpop.f32.mrb[0].mxu0
    %v335 = vpop.f32.mrb[0].mxu0
    %336 = vdwg.mxu0
    %v337 = vmax.f32 %v332, 0.0
    %338 = vadd.xlane.f32.xlu0 %v337
    %v339 = vpop.xlane.xlu0 %338
    %v340 = vmul.f32 %v339, 0.03125
    %v341 = vsub.f32 %v337, %v340
    %v342 = vmul.f32 %v341, %v341
    %343 = vadd.xlane.f32.xlu0 %v342
    %v344 = vpop.xlane.xlu0 %343
    %v345 = vmul.f32 %v340, 96.0
    %v346 = vmul.f32 %v345, %v340
    %v347 = vsub.f32 %v344, %v346
    %v348 = vmul.f32 %v347, 0.03125
    %v349 = vadd.f32 %v348, 1e-05
    %v350 = vrsqrt.pop %v349
    %v351 = vmul.f32 %v341, %v350
    %v352 = vld [vmem:[%s7] sm:$0x1]
    %v354 = vlaneseq
    %v355 = vshrl.u32 %v354, 7
    %v356 = vsub.s32 0, %v355
    %v357 = vrot.slane %v352, %v356
    %v359 = vmul.f32 %v351, %v357
    %v360 = vld [vmem:[%s8] sm:$0x1]
    %v362 = vlaneseq
    %v363 = vshrl.u32 %v362, 7
    %v364 = vsub.s32 0, %v363
    %v365 = vrot.slane %v360, %v364
    %v367 = vadd.f32 %v359, %v365
    %v368 = vpack.c.bf16 %v367, %v367
    %v369 = vld [vmem:[#allocation7] sm:$0xf]
    %v370 = vld [vmem:[#allocation7 + $0x4] sm:$0xf]
    %v371 = vld [vmem:[#allocation7 + $0x8] sm:$0xf]
    %v372 = vld [vmem:[#allocation7 + $0xc] sm:$0xf]
    %v373 = vld [vmem:[#allocation7 + $0x10] sm:$0xf]
    %v374 = vld [vmem:[#allocation7 + $0x14] sm:$0xf]
    %v375 = vld [vmem:[#allocation7 + $0x18] sm:$0xf]
    %v376 = vld [vmem:[#allocation7 + $0x1c] sm:$0xf]
    %v377 = vld [vmem:[#allocation7 + $0x20] sm:$0xf]
    %v378 = vld [vmem:[#allocation7 + $0x24] sm:$0xf]
    %v379 = vld [vmem:[#allocation7 + $0x28] sm:$0xf]
    %v380 = vld [vmem:[#allocation7 + $0x2c] sm:$0xf]
    %v381 = vld [vmem:[#allocation7 + $0x30] sm:$0xf]
    %v382 = vld [vmem:[#allocation7 + $0x34] sm:$0xf]
    %v383 = vld [vmem:[#allocation7 + $0x38] sm:$0xf]
    %v384 = vld [vmem:[#allocation7 + $0x3c] sm:$0xf]
    %v385 = vld [vmem:[%s10] sm:$0x1]
    %v387 = vlaneseq
    %v388 = vshrl.u32 %v387, 7
    %v389 = vsub.s32 0, %v388
    %v390 = vrot.slane %v385, %v389
    %v408 = vunpack.c.l.b16 %v369
    %v409 = vunpack.c.l.b16 %v370
    %v410 = vunpack.c.l.b16 %v371
    %v411 = vunpack.c.l.b16 %v372
    %v412 = vunpack.c.l.b16 %v373
    %v413 = vunpack.c.l.b16 %v374
    %v414 = vunpack.c.l.b16 %v375
    %v415 = vunpack.c.l.b16 %v376
    %v416 = vunpack.c.l.b16 %v377
    %v417 = vunpack.c.l.b16 %v378
    %v418 = vunpack.c.l.b16 %v379
    %v419 = vunpack.c.l.b16 %v380
    %v420 = vunpack.c.l.b16 %v381
    %v421 = vunpack.c.l.b16 %v382
    %v422 = vunpack.c.l.b16 %v383
    %v423 = vunpack.c.l.b16 %v384
    %v424 = vpack.c.b16 %v409, %v408
    %v425 = vpack.c.b16 %v411, %v410
    %v426 = vpack.c.b16 %v413, %v412
    %v427 = vpack.c.b16 %v415, %v414
    %v428 = vpack.c.b16 %v417, %v416
    %v429 = vpack.c.b16 %v419, %v418
    %v430 = vpack.c.b16 %v421, %v420
    %v431 = vpack.c.b16 %v423, %v422
    %440 = vmatprep.subr.bf16.mxu0 0
    %441 = vmatpush1.bf16.msra.mxu0 %v424
    %442 = vmatprep.subr.bf16.mxu0 0
    %443 = vmatpush1.bf16.msra.mxu0 %v425
    %444 = vmatprep.subr.bf16.mxu0 0
    %445 = vmatpush1.bf16.msra.mxu0 %v426
    %446 = vmatprep.subr.bf16.mxu0 0
    %447 = vmatpush1.bf16.msra.mxu0 %v427
    %448 = vmatprep.subr.bf16.mxu0 0
    %449 = vmatpush1.bf16.msra.mxu0 %v428
    %450 = vmatprep.subr.bf16.mxu0 0
    %451 = vmatpush1.bf16.msra.mxu0 %v429
    %452 = vmatprep.subr.bf16.mxu0 0
    %453 = vmatpush1.bf16.msra.mxu0 %v430
    %454 = vmatprep.subr.bf16.mxu0 0
    %455 = vmatpush1.bf16.msra.mxu0 %v431
    %456 = vmatprep.subr.bf16.mxu0 0
    %457 = vmatpush1.bf16.msra.mxu0 0
    %458 = vmatprep.subr.bf16.mxu0 0
    %459 = vmatpush1.bf16.msra.mxu0 0
    %460 = vmatprep.subr.bf16.mxu0 0
    %461 = vmatpush1.bf16.msra.mxu0 0
    %462 = vmatprep.subr.bf16.mxu0 0
    %463 = vmatpush1.bf16.msra.mxu0 0
    %464 = vmatprep.subr.bf16.mxu0 0
    %465 = vmatpush1.bf16.msra.mxu0 0
    %466 = vmatprep.subr.bf16.mxu0 0
    %467 = vmatpush1.bf16.msra.mxu0 0
    %468 = vmatprep.subr.bf16.mxu0 0
    %469 = vmatpush1.bf16.msra.mxu0 0
    %470 = vmatprep.subr.bf16.mxu0 0
    %471 = vmatpush1.bf16.msra.mxu0 0
    %472 = vmatprep.mubr.bf16.mxu0 0
    %473 = vmatmul.mubr.bf16.gmra.mrb[0].mxu0 %v368
    %v474 = vpop.f32.mrb[0].mxu0
    %v475 = vadd.f32 %v390, %v474
    %v476 = vpop.f32.mrb[0].mxu0
    %v477 = vpop.f32.mrb[0].mxu0
    %v478 = vpop.f32.mrb[0].mxu0
    %479 = vdwg.mxu0
    %vm480 = vcmask 130048
    %481 = vst.msk [vmem:[#allocation8] sm:$0xff] %vm480, %v475
    // Predicated region
    $region58: #{_fused_forward.1} parent=1 // pred_check
      _
    $region59: #{_fused_forward.1} parent=1 // pred_check_branch
      %483 = sbr.rel (0) target = $region61
    $region60: #{_fused_forward.1} parent=1 // pred_region
      %s485 = ssub.s32 128, 128
      %486 = vsyncadd [#allocation4], %s485
      %s488 = sshll.u32 [#allocation8], 4
      %s489 = int_to_ptr.vmem [resolvable:$true] %s488
      %491 = dma.vmem_to_hbm [thread:$0]  %s489, 128, %s11, [#allocation4]
    $region61: #{_fused_forward.1} parent=1 // pred_fallthru
      _
    // Predicated region
    $region62: #{_fused_forward.1} parent=1 // pred_check
      _
    $region63: #{_fused_forward.1} parent=1 // pred_check_branch
      %493 = sbr.rel (0) target = $region65
    $region64: #{_fused_forward.1} parent=1 // pred_region
      %494 = dma.done [#allocation4], 128
    $region65: #{_fused_forward.1} parent=1 // pred_fallthru
      _
    %495 = vsyncpa [#allocation3], 1
    %496 = vsyncpa [#allocation6], 1
    %497 = vsyncpa [#allocation4], 1

</llo_original>
